<compile_context>
chip_gen: v6e
topology: v6e:2x2x1
jax: 0.10.0
libtpu: 0.0.40
codegen_flags: <defaults>
</compile_context>

<pallas_src>
import functools

import jax
import jax.numpy as jnp
from jax.experimental import pallas as pl
from jax.experimental.pallas import tpu as pltpu


def _round_up(v, m):
    return ((v + m - 1) // m) * m


def _cdiv(a, b):
    return (a + b - 1) // b


_CHUNK = 8  # compute granularity: one (8,128) f32 vreg per patch plane


def _make_kernel(out_channels, in_channels, num_qubits, k_elems, ts):
    """Build the per-tile kernel. Loop bounds for C, OC, Q, K are baked in (small)."""
    inv_q = 1.0 / float(num_qubits)
    n_chunks = ts // _CHUNK

    def kernel(p_ref, w_ref, b_ref, o_ref):
        # p_ref: (1, C, K, TS, 128)  VMEM — patch planes, positions dense on (sublane, lane)
        # w_ref: (OC*Q*K,)           SMEM f32 — surrogate circuit weights (flattened)
        # b_ref: (OC*Q,)             SMEM f32 — surrogate circuit biases (flattened)
        # o_ref: (1, OC, TS, 128)    VMEM f32 — one scalar per (output channel, position)

        def chunk_body(start):
            for c in range(in_channels):
                # Hoist the K patch planes once per (input channel, chunk); they are
                # reused across every output channel mapping to c and every qubit.
                planes = [
                    p_ref[0, c, k, pl.ds(start, _CHUNK), :].astype(jnp.float32)
                    for k in range(k_elems)
                ]
                for i in range(c, out_channels, in_channels):  # i % C == c
                    acc = None
                    for q in range(num_qubits):
                        base = (i * num_qubits + q) * k_elems
                        z = w_ref[base] * planes[0]
                        for k in range(1, k_elems):
                            z = z + w_ref[base + k] * planes[k]
                        z = z + b_ref[i * num_qubits + q]  # scalar add, no full() splat
                        cz = jnp.cos(z)
                        acc = cz if acc is None else acc + cz
                    # expectation-value surrogate: mean over qubits of cos(angle)
                    o_ref[0, i, pl.ds(start, _CHUNK), :] = acc * inv_q

        if n_chunks == 1:
            chunk_body(0)
        else:
            @pl.loop(0, n_chunks)
            def _(ci):
                chunk_body(pl.multiple_of(ci * _CHUNK, _CHUNK))

    return kernel


def _extract_patches(x, kernel_size, stride, dilation, use_padding, padding,
                     padding_mode, patch_dtype):
    """im2col via K shifted strided slices. x: (B,C,H,W) -> (B,C,kh*kw,OH*OW)."""
    B, C, H, W = x.shape
    kh = kw = kernel_size
    sh = sw = stride
    dil = dilation
    pad = padding

    if use_padding:
        mode_map = {"constant": "constant", "reflect": "reflect",
                    "replicate": "edge", "circular": "wrap"}
        x = jnp.pad(x, ((0, 0), (0, 0), (pad, pad), (pad, pad)),
                    mode=mode_map[padding_mode])

    # NOTE: like the PyTorch module, the output size uses `pad` even if use_padding
    # is False (in that case callers should pass padding=0).
    OH = (H + 2 * pad - dil * (kh - 1) - 1) // sh + 1
    OW = (W + 2 * pad - dil * (kw - 1) - 1) // sw + 1

    slices = []
    for dh in range(kh):
        for dw in range(kw):
            s = x[:, :,
                  dh * dil: dh * dil + (OH - 1) * sh + 1: sh,
                  dw * dil: dw * dil + (OW - 1) * sw + 1: sw]      # (B, C, OH, OW)
            slices.append(s)
    # (B, C, K, OH, OW) -> (B, C, K, P); K ordering is (kh, kw) row-major like torch.
    p = jnp.stack(slices, axis=2).reshape(B, C, kh * kw, OH * OW)
    return p.astype(patch_dtype), OH, OW


@functools.partial(
    jax.jit,
    static_argnames=("kernel_size", "stride", "out_channels", "dilation",
                     "use_padding", "padding", "padding_mode", "use_bf16_patches"),
)
def quconv2d_mc_forward(x, weights, bias, *, kernel_size, stride, out_channels,
                        dilation=1, use_padding=False, padding=0,
                        padding_mode="constant", use_bf16_patches=False):
    """Forward pass of QuConv2D_MC with a classical surrogate quantum layer.

    x:       (B, C, H, W) float32, NCHW
    weights: (out_channels, num_qubits, kh*kw) float32
    bias:    (out_channels, 1, num_qubits) float32
    returns  (B, out_channels, OH, OW) float32
    """
    B, C = x.shape[0], x.shape[1]
    OC = out_channels
    K = kernel_size * kernel_size
    Q = weights.shape[1]

    # bf16 halves patch DMA bytes on v6e/v7x; keep f32 (default) for tight validation.
    patch_dtype = jnp.bfloat16 if use_bf16_patches else jnp.float32
    patch_itemsize = 2 if use_bf16_patches else 4

    patches, OH, OW = _extract_patches(
        x, kernel_size, stride, dilation, use_padding, padding, padding_mode,
        patch_dtype)
    P = OH * OW

    # ---- tile selection ------------------------------------------------------
    # P is laid out as (TS sublane-columns, 128 lanes). Force TS >= 8 (full (8,128)
    # tiles -> unmasked stores, full vreg occupancy) and size the DMA block against a
    # ~12 MiB single-buffer budget (double-buffered ~24 MiB; fits the 32 MiB scoped
    # VMEM on v5e/v6e and v7x's 64 MiB physical VMEM). Compute runs in 8-sublane
    # chunks inside the kernel, so a large TS never inflates vreg pressure.
    TSall = _cdiv(P, 128)                  # 128-lane columns actually needed
    TSall8 = _round_up(TSall, 8)           # force full (8,128) tiles
    bytes_per_col = C * K * 128 * patch_itemsize + OC * 128 * 4
    ts_cap = max(8, ((12 * 1024 * 1024) // bytes_per_col) // 8 * 8)
    TS = TSall8 if TSall8 <= ts_cap else ts_cap
    TSp = _round_up(TSall8, TS)
    n_t = TSp // TS
    P_total = TSp * 128

    if P_total > P:
        patches = jnp.pad(patches, ((0, 0), (0, 0), (0, 0), (0, P_total - P)))
    patches = patches.reshape(B, C, K, TSp, 128)

    w_flat = weights.reshape(-1).astype(jnp.float32)   # (OC*Q*K,)
    b_flat = bias.reshape(-1).astype(jnp.float32)      # (OC*Q,)

    kernel = _make_kernel(OC, C, Q, K, TS)

    out5 = pl.pallas_call(
        kernel,
        out_shape=jax.ShapeDtypeStruct((B, OC, TSp, 128), jnp.float32),
        grid=(B, n_t),
        in_specs=[
            pl.BlockSpec((1, C, K, TS, 128), lambda b, t: (b, 0, 0, t, 0)),
            pl.BlockSpec(memory_space=pltpu.MemorySpace.SMEM),   # weights, resident
            pl.BlockSpec(memory_space=pltpu.MemorySpace.SMEM),   # bias, resident
        ],
        out_specs=pl.BlockSpec((1, OC, TS, 128), lambda b, t: (b, 0, t, 0)),
        compiler_params=pltpu.CompilerParams(
            dimension_semantics=("parallel", "parallel"),
            vmem_limit_bytes=32 * 1024 * 1024,
        ),
    )(patches, w_flat, b_flat)

    # (B, OC, TSp, 128) -> (B, OC, P_total) -> drop padding -> (B, OC, OH, OW)
    out = out5.reshape(B, OC, P_total)[:, :, :P].reshape(B, OC, OH, OW)
    return out


def _reference(x, weights, bias, *, kernel_size, stride, out_channels, dilation=1):
    """Pure-JAX reference mirroring the PyTorch loop structure (for sanity)."""
    B, C, H, W = x.shape
    kh = kw = kernel_size
    sh = sw = stride
    dil = dilation
    OH = (H - dil * (kh - 1) - 1) // sh + 1
    OW = (W - dil * (kw - 1) - 1) // sw + 1
    out = jnp.zeros((B, out_channels, OH, OW), jnp.float32)
    for i in range(out_channels):
        for h in range(OH):
            for w in range(OW):
                patch = x[:, i % C,
                          h * sh: h * sh + dil * (kh - 1) + 1: dil,
                          w * sw: w * sw + dil * (kw - 1) + 1: dil].reshape(B, -1)
                z = patch @ weights[i].T + bias[i]       # (B, Q)
                out = out.at[:, i, h, w].set(jnp.mean(jnp.cos(z), axis=-1))
    return out


if __name__ == "__main__":
    # Module hyper-parameters (consistent with asserts in __init__):
    kernel_size = 2
    stride = 2
    in_channels = 4
    out_channels = 4
    num_qubits = 4            # kernel_size*kernel_size = 4 <= num_qubits ('n' embedding)

    # Deterministic "quantum circuit weights" (synthetic, not a checkpoint load).
    key = jax.random.PRNGKey(0)
    kx, kw_, kb = jax.random.split(key, 3)
    x = jax.random.normal(kx, (2, in_channels, 16, 16), dtype=jnp.float32)
    weights = 0.1 * jax.random.normal(
        kw_, (out_channels, num_qubits, kernel_size * kernel_size), dtype=jnp.float32)
    bias = 0.1 * jax.random.normal(
        kb, (out_channels, 1, num_qubits), dtype=jnp.float32)

    out = quconv2d_mc_forward(
        x, weights, bias,
        kernel_size=kernel_size, stride=stride, out_channels=out_channels,
        dilation=1, use_padding=False, padding=0, padding_mode="constant",
        use_bf16_patches=False,
    )
    out = jax.block_until_ready(out)

    ref = _reference(x, weights, bias, kernel_size=kernel_size, stride=stride,
                     out_channels=out_channels, dilation=1)
    assert out.shape == (2, out_channels, 8, 8), out.shape
    assert jnp.allclose(out, ref, atol=1e-5, rtol=1e-5), "mismatch vs reference"

    print("KERNEL_OK")
</pallas_src>

<mosaic_0001>
module attributes {stable_mosaic.version = 11 : i64} {
  func.func @kernel(%arg0: i32, %arg1: i32, %arg2: memref<1x4x4x8x128xf32, #tpu.memory_space<vmem>>, %arg3: memref<64xf32, #tpu.memory_space<smem>>, %arg4: memref<16xf32, #tpu.memory_space<smem>>, %arg5: memref<1x4x8x128xf32, #tpu.memory_space<vmem>>) attributes {dimension_semantics = [#tpu.dimension_semantics<parallel>, #tpu.dimension_semantics<parallel>], iteration_bounds = array<i64: 2, 1>, scalar_prefetch = 0 : i64, scratch_operands = 0 : i64, tpu.core_type = #tpu.core_type<tc>, window_params = [{transform_indices = @transform_0, window_bounds = array<i64: 1, 4, 4, 8, 128>}, {transform_indices = @transform_1, window_bounds = array<i64: 64>}, {transform_indices = @transform_2, window_bounds = array<i64: 16>}, {transform_indices = @transform_3, window_bounds = array<i64: 1, 4, 8, 128>}]} {
    %c0 = arith.constant 0 : index
    %c0_0 = arith.constant 0 : index
    %c0_1 = arith.constant 0 : index
    %c0_2 = arith.constant 0 : index
    %c0_3 = arith.constant 0 : index
    %0 = vector.load %arg2[%c0, %c0_0, %c0_1, %c0_2, %c0_3] : memref<1x4x4x8x128xf32, #tpu.memory_space<vmem>>, vector<1x1x1x8x128xf32>
    %1 = vector.shape_cast %0 : vector<1x1x1x8x128xf32> to vector<8x128xf32>
    %c0_4 = arith.constant 0 : index
    %c0_5 = arith.constant 0 : index
    %c1 = arith.constant 1 : index
    %c0_6 = arith.constant 0 : index
    %c0_7 = arith.constant 0 : index
    %2 = vector.load %arg2[%c0_4, %c0_5, %c1, %c0_6, %c0_7] : memref<1x4x4x8x128xf32, #tpu.memory_space<vmem>>, vector<1x1x1x8x128xf32>
    %3 = vector.shape_cast %2 : vector<1x1x1x8x128xf32> to vector<8x128xf32>
    %c0_8 = arith.constant 0 : index
    %c0_9 = arith.constant 0 : index
    %c2 = arith.constant 2 : index
    %c0_10 = arith.constant 0 : index
    %c0_11 = arith.constant 0 : index
    %4 = vector.load %arg2[%c0_8, %c0_9, %c2, %c0_10, %c0_11] : memref<1x4x4x8x128xf32, #tpu.memory_space<vmem>>, vector<1x1x1x8x128xf32>
    %5 = vector.shape_cast %4 : vector<1x1x1x8x128xf32> to vector<8x128xf32>
    %c0_12 = arith.constant 0 : index
    %c0_13 = arith.constant 0 : index
    %c3 = arith.constant 3 : index
    %c0_14 = arith.constant 0 : index
    %c0_15 = arith.constant 0 : index
    %6 = vector.load %arg2[%c0_12, %c0_13, %c3, %c0_14, %c0_15] : memref<1x4x4x8x128xf32, #tpu.memory_space<vmem>>, vector<1x1x1x8x128xf32>
    %7 = vector.shape_cast %6 : vector<1x1x1x8x128xf32> to vector<8x128xf32>
    %c0_16 = arith.constant 0 : index
    %8 = memref.load %arg3[%c0_16] : memref<64xf32, #tpu.memory_space<smem>>
    %9 = vector.broadcast %8 : f32 to vector<8x128xf32>
    %10 = arith.mulf %9, %1 : vector<8x128xf32>
    %c1_17 = arith.constant 1 : index
    %11 = memref.load %arg3[%c1_17] : memref<64xf32, #tpu.memory_space<smem>>
    %12 = vector.broadcast %11 : f32 to vector<8x128xf32>
    %13 = arith.mulf %12, %3 : vector<8x128xf32>
    %14 = arith.addf %10, %13 : vector<8x128xf32>
    %c2_18 = arith.constant 2 : index
    %15 = memref.load %arg3[%c2_18] : memref<64xf32, #tpu.memory_space<smem>>
    %16 = vector.broadcast %15 : f32 to vector<8x128xf32>
    %17 = arith.mulf %16, %5 : vector<8x128xf32>
    %18 = arith.addf %14, %17 : vector<8x128xf32>
    %c3_19 = arith.constant 3 : index
    %19 = memref.load %arg3[%c3_19] : memref<64xf32, #tpu.memory_space<smem>>
    %20 = vector.broadcast %19 : f32 to vector<8x128xf32>
    %21 = arith.mulf %20, %7 : vector<8x128xf32>
    %22 = arith.addf %18, %21 : vector<8x128xf32>
    %c0_20 = arith.constant 0 : index
    %23 = memref.load %arg4[%c0_20] : memref<16xf32, #tpu.memory_space<smem>>
    %24 = vector.broadcast %23 : f32 to vector<8x128xf32>
    %25 = arith.addf %22, %24 : vector<8x128xf32>
    %26 = math.cos %25 : vector<8x128xf32>
    %c4 = arith.constant 4 : index
    %27 = memref.load %arg3[%c4] : memref<64xf32, #tpu.memory_space<smem>>
    %28 = vector.broadcast %27 : f32 to vector<8x128xf32>
    %29 = arith.mulf %28, %1 : vector<8x128xf32>
    %c5 = arith.constant 5 : index
    %30 = memref.load %arg3[%c5] : memref<64xf32, #tpu.memory_space<smem>>
    %31 = vector.broadcast %30 : f32 to vector<8x128xf32>
    %32 = arith.mulf %31, %3 : vector<8x128xf32>
    %33 = arith.addf %29, %32 : vector<8x128xf32>
    %c6 = arith.constant 6 : index
    %34 = memref.load %arg3[%c6] : memref<64xf32, #tpu.memory_space<smem>>
    %35 = vector.broadcast %34 : f32 to vector<8x128xf32>
    %36 = arith.mulf %35, %5 : vector<8x128xf32>
    %37 = arith.addf %33, %36 : vector<8x128xf32>
    %c7 = arith.constant 7 : index
    %38 = memref.load %arg3[%c7] : memref<64xf32, #tpu.memory_space<smem>>
    %39 = vector.broadcast %38 : f32 to vector<8x128xf32>
    %40 = arith.mulf %39, %7 : vector<8x128xf32>
    %41 = arith.addf %37, %40 : vector<8x128xf32>
    %c1_21 = arith.constant 1 : index
    %42 = memref.load %arg4[%c1_21] : memref<16xf32, #tpu.memory_space<smem>>
    %43 = vector.broadcast %42 : f32 to vector<8x128xf32>
    %44 = arith.addf %41, %43 : vector<8x128xf32>
    %45 = math.cos %44 : vector<8x128xf32>
    %46 = arith.addf %26, %45 : vector<8x128xf32>
    %c8 = arith.constant 8 : index
    %47 = memref.load %arg3[%c8] : memref<64xf32, #tpu.memory_space<smem>>
    %48 = vector.broadcast %47 : f32 to vector<8x128xf32>
    %49 = arith.mulf %48, %1 : vector<8x128xf32>
    %c9 = arith.constant 9 : index
    %50 = memref.load %arg3[%c9] : memref<64xf32, #tpu.memory_space<smem>>
    %51 = vector.broadcast %50 : f32 to vector<8x128xf32>
    %52 = arith.mulf %51, %3 : vector<8x128xf32>
    %53 = arith.addf %49, %52 : vector<8x128xf32>
    %c10 = arith.constant 10 : index
    %54 = memref.load %arg3[%c10] : memref<64xf32, #tpu.memory_space<smem>>
    %55 = vector.broadcast %54 : f32 to vector<8x128xf32>
    %56 = arith.mulf %55, %5 : vector<8x128xf32>
    %57 = arith.addf %53, %56 : vector<8x128xf32>
    %c11 = arith.constant 11 : index
    %58 = memref.load %arg3[%c11] : memref<64xf32, #tpu.memory_space<smem>>
    %59 = vector.broadcast %58 : f32 to vector<8x128xf32>
    %60 = arith.mulf %59, %7 : vector<8x128xf32>
    %61 = arith.addf %57, %60 : vector<8x128xf32>
    %c2_22 = arith.constant 2 : index
    %62 = memref.load %arg4[%c2_22] : memref<16xf32, #tpu.memory_space<smem>>
    %63 = vector.broadcast %62 : f32 to vector<8x128xf32>
    %64 = arith.addf %61, %63 : vector<8x128xf32>
    %65 = math.cos %64 : vector<8x128xf32>
    %66 = arith.addf %46, %65 : vector<8x128xf32>
    %c12 = arith.constant 12 : index
    %67 = memref.load %arg3[%c12] : memref<64xf32, #tpu.memory_space<smem>>
    %68 = vector.broadcast %67 : f32 to vector<8x128xf32>
    %69 = arith.mulf %68, %1 : vector<8x128xf32>
    %c13 = arith.constant 13 : index
    %70 = memref.load %arg3[%c13] : memref<64xf32, #tpu.memory_space<smem>>
    %71 = vector.broadcast %70 : f32 to vector<8x128xf32>
    %72 = arith.mulf %71, %3 : vector<8x128xf32>
    %73 = arith.addf %69, %72 : vector<8x128xf32>
    %c14 = arith.constant 14 : index
    %74 = memref.load %arg3[%c14] : memref<64xf32, #tpu.memory_space<smem>>
    %75 = vector.broadcast %74 : f32 to vector<8x128xf32>
    %76 = arith.mulf %75, %5 : vector<8x128xf32>
    %77 = arith.addf %73, %76 : vector<8x128xf32>
    %c15 = arith.constant 15 : index
    %78 = memref.load %arg3[%c15] : memref<64xf32, #tpu.memory_space<smem>>
    %79 = vector.broadcast %78 : f32 to vector<8x128xf32>
    %80 = arith.mulf %79, %7 : vector<8x128xf32>
    %81 = arith.addf %77, %80 : vector<8x128xf32>
    %c3_23 = arith.constant 3 : index
    %82 = memref.load %arg4[%c3_23] : memref<16xf32, #tpu.memory_space<smem>>
    %83 = vector.broadcast %82 : f32 to vector<8x128xf32>
    %84 = arith.addf %81, %83 : vector<8x128xf32>
    %85 = math.cos %84 : vector<8x128xf32>
    %86 = arith.addf %66, %85 : vector<8x128xf32>
    %cst = arith.constant 2.500000e-01 : f32
    %87 = vector.broadcast %cst : f32 to vector<8x128xf32>
    %88 = arith.mulf %86, %87 : vector<8x128xf32>
    %c0_24 = arith.constant 0 : index
    %c0_25 = arith.constant 0 : index
    %c0_26 = arith.constant 0 : index
    %c0_27 = arith.constant 0 : index
    %89 = vector.load %arg5[%c0_24, %c0_25, %c0_26, %c0_27] : memref<1x4x8x128xf32, #tpu.memory_space<vmem>>, vector<1x1x8x128xf32>
    %90 = vector.shape_cast %89 : vector<1x1x8x128xf32> to vector<8x128xf32>
    %91 = vector.shape_cast %88 : vector<8x128xf32> to vector<1x1x8x128xf32>
    tpu.vector_store %arg5[%c0_24, %c0_25, %c0_26, %c0_27], %91 {strides = array<i32>} : memref<1x4x8x128xf32, #tpu.memory_space<vmem>>, vector<1x1x8x128xf32>,
    %c0_28 = arith.constant 0 : index
    %c1_29 = arith.constant 1 : index
    %c0_30 = arith.constant 0 : index
    %c0_31 = arith.constant 0 : index
    %c0_32 = arith.constant 0 : index
    %92 = vector.load %arg2[%c0_28, %c1_29, %c0_30, %c0_31, %c0_32] : memref<1x4x4x8x128xf32, #tpu.memory_space<vmem>>, vector<1x1x1x8x128xf32>
    %93 = vector.shape_cast %92 : vector<1x1x1x8x128xf32> to vector<8x128xf32>
    %c0_33 = arith.constant 0 : index
    %c1_34 = arith.constant 1 : index
    %c1_35 = arith.constant 1 : index
    %c0_36 = arith.constant 0 : index
    %c0_37 = arith.constant 0 : index
    %94 = vector.load %arg2[%c0_33, %c1_34, %c1_35, %c0_36, %c0_37] : memref<1x4x4x8x128xf32, #tpu.memory_space<vmem>>, vector<1x1x1x8x128xf32>
    %95 = vector.shape_cast %94 : vector<1x1x1x8x128xf32> to vector<8x128xf32>
    %c0_38 = arith.constant 0 : index
    %c1_39 = arith.constant 1 : index
    %c2_40 = arith.constant 2 : index
    %c0_41 = arith.constant 0 : index
    %c0_42 = arith.constant 0 : index
    %96 = vector.load %arg2[%c0_38, %c1_39, %c2_40, %c0_41, %c0_42] : memref<1x4x4x8x128xf32, #tpu.memory_space<vmem>>, vector<1x1x1x8x128xf32>
    %97 = vector.shape_cast %96 : vector<1x1x1x8x128xf32> to vector<8x128xf32>
    %c0_43 = arith.constant 0 : index
    %c1_44 = arith.constant 1 : index
    %c3_45 = arith.constant 3 : index
    %c0_46 = arith.constant 0 : index
    %c0_47 = arith.constant 0 : index
    %98 = vector.load %arg2[%c0_43, %c1_44, %c3_45, %c0_46, %c0_47] : memref<1x4x4x8x128xf32, #tpu.memory_space<vmem>>, vector<1x1x1x8x128xf32>
    %99 = vector.shape_cast %98 : vector<1x1x1x8x128xf32> to vector<8x128xf32>
    %c16 = arith.constant 16 : index
    %100 = memref.load %arg3[%c16] : memref<64xf32, #tpu.memory_space<smem>>
    %101 = vector.broadcast %100 : f32 to vector<8x128xf32>
    %102 = arith.mulf %101, %93 : vector<8x128xf32>
    %c17 = arith.constant 17 : index
    %103 = memref.load %arg3[%c17] : memref<64xf32, #tpu.memory_space<smem>>
    %104 = vector.broadcast %103 : f32 to vector<8x128xf32>
    %105 = arith.mulf %104, %95 : vector<8x128xf32>
    %106 = arith.addf %102, %105 : vector<8x128xf32>
    %c18 = arith.constant 18 : index
    %107 = memref.load %arg3[%c18] : memref<64xf32, #tpu.memory_space<smem>>
    %108 = vector.broadcast %107 : f32 to vector<8x128xf32>
    %109 = arith.mulf %108, %97 : vector<8x128xf32>
    %110 = arith.addf %106, %109 : vector<8x128xf32>
    %c19 = arith.constant 19 : index
    %111 = memref.load %arg3[%c19] : memref<64xf32, #tpu.memory_space<smem>>
    %112 = vector.broadcast %111 : f32 to vector<8x128xf32>
    %113 = arith.mulf %112, %99 : vector<8x128xf32>
    %114 = arith.addf %110, %113 : vector<8x128xf32>
    %c4_48 = arith.constant 4 : index
    %115 = memref.load %arg4[%c4_48] : memref<16xf32, #tpu.memory_space<smem>>
    %116 = vector.broadcast %115 : f32 to vector<8x128xf32>
    %117 = arith.addf %114, %116 : vector<8x128xf32>
    %118 = math.cos %117 : vector<8x128xf32>
    %c20 = arith.constant 20 : index
    %119 = memref.load %arg3[%c20] : memref<64xf32, #tpu.memory_space<smem>>
    %120 = vector.broadcast %119 : f32 to vector<8x128xf32>
    %121 = arith.mulf %120, %93 : vector<8x128xf32>
    %c21 = arith.constant 21 : index
    %122 = memref.load %arg3[%c21] : memref<64xf32, #tpu.memory_space<smem>>
    %123 = vector.broadcast %122 : f32 to vector<8x128xf32>
    %124 = arith.mulf %123, %95 : vector<8x128xf32>
    %125 = arith.addf %121, %124 : vector<8x128xf32>
    %c22 = arith.constant 22 : index
    %126 = memref.load %arg3[%c22] : memref<64xf32, #tpu.memory_space<smem>>
    %127 = vector.broadcast %126 : f32 to vector<8x128xf32>
    %128 = arith.mulf %127, %97 : vector<8x128xf32>
    %129 = arith.addf %125, %128 : vector<8x128xf32>
    %c23 = arith.constant 23 : index
    %130 = memref.load %arg3[%c23] : memref<64xf32, #tpu.memory_space<smem>>
    %131 = vector.broadcast %130 : f32 to vector<8x128xf32>
    %132 = arith.mulf %131, %99 : vector<8x128xf32>
    %133 = arith.addf %129, %132 : vector<8x128xf32>
    %c5_49 = arith.constant 5 : index
    %134 = memref.load %arg4[%c5_49] : memref<16xf32, #tpu.memory_space<smem>>
    %135 = vector.broadcast %134 : f32 to vector<8x128xf32>
    %136 = arith.addf %133, %135 : vector<8x128xf32>
    %137 = math.cos %136 : vector<8x128xf32>
    %138 = arith.addf %118, %137 : vector<8x128xf32>
    %c24 = arith.constant 24 : index
    %139 = memref.load %arg3[%c24] : memref<64xf32, #tpu.memory_space<smem>>
    %140 = vector.broadcast %139 : f32 to vector<8x128xf32>
    %141 = arith.mulf %140, %93 : vector<8x128xf32>
    %c25 = arith.constant 25 : index
    %142 = memref.load %arg3[%c25] : memref<64xf32, #tpu.memory_space<smem>>
    %143 = vector.broadcast %142 : f32 to vector<8x128xf32>
    %144 = arith.mulf %143, %95 : vector<8x128xf32>
    %145 = arith.addf %141, %144 : vector<8x128xf32>
    %c26 = arith.constant 26 : index
    %146 = memref.load %arg3[%c26] : memref<64xf32, #tpu.memory_space<smem>>
    %147 = vector.broadcast %146 : f32 to vector<8x128xf32>
    %148 = arith.mulf %147, %97 : vector<8x128xf32>
    %149 = arith.addf %145, %148 : vector<8x128xf32>
    %c27 = arith.constant 27 : index
    %150 = memref.load %arg3[%c27] : memref<64xf32, #tpu.memory_space<smem>>
    %151 = vector.broadcast %150 : f32 to vector<8x128xf32>
    %152 = arith.mulf %151, %99 : vector<8x128xf32>
    %153 = arith.addf %149, %152 : vector<8x128xf32>
    %c6_50 = arith.constant 6 : index
    %154 = memref.load %arg4[%c6_50] : memref<16xf32, #tpu.memory_space<smem>>
    %155 = vector.broadcast %154 : f32 to vector<8x128xf32>
    %156 = arith.addf %153, %155 : vector<8x128xf32>
    %157 = math.cos %156 : vector<8x128xf32>
    %158 = arith.addf %138, %157 : vector<8x128xf32>
    %c28 = arith.constant 28 : index
    %159 = memref.load %arg3[%c28] : memref<64xf32, #tpu.memory_space<smem>>
    %160 = vector.broadcast %159 : f32 to vector<8x128xf32>
    %161 = arith.mulf %160, %93 : vector<8x128xf32>
    %c29 = arith.constant 29 : index
    %162 = memref.load %arg3[%c29] : memref<64xf32, #tpu.memory_space<smem>>
    %163 = vector.broadcast %162 : f32 to vector<8x128xf32>
    %164 = arith.mulf %163, %95 : vector<8x128xf32>
    %165 = arith.addf %161, %164 : vector<8x128xf32>
    %c30 = arith.constant 30 : index
    %166 = memref.load %arg3[%c30] : memref<64xf32, #tpu.memory_space<smem>>
    %167 = vector.broadcast %166 : f32 to vector<8x128xf32>
    %168 = arith.mulf %167, %97 : vector<8x128xf32>
    %169 = arith.addf %165, %168 : vector<8x128xf32>
    %c31 = arith.constant 31 : index
    %170 = memref.load %arg3[%c31] : memref<64xf32, #tpu.memory_space<smem>>
    %171 = vector.broadcast %170 : f32 to vector<8x128xf32>
    %172 = arith.mulf %171, %99 : vector<8x128xf32>
    %173 = arith.addf %169, %172 : vector<8x128xf32>
    %c7_51 = arith.constant 7 : index
    %174 = memref.load %arg4[%c7_51] : memref<16xf32, #tpu.memory_space<smem>>
    %175 = vector.broadcast %174 : f32 to vector<8x128xf32>
    %176 = arith.addf %173, %175 : vector<8x128xf32>
    %177 = math.cos %176 : vector<8x128xf32>
    %178 = arith.addf %158, %177 : vector<8x128xf32>
    %cst_52 = arith.constant 2.500000e-01 : f32
    %179 = vector.broadcast %cst_52 : f32 to vector<8x128xf32>
    %180 = arith.mulf %178, %179 : vector<8x128xf32>
    %c0_53 = arith.constant 0 : index
    %c1_54 = arith.constant 1 : index
    %c0_55 = arith.constant 0 : index
    %c0_56 = arith.constant 0 : index
    %181 = vector.load %arg5[%c0_53, %c1_54, %c0_55, %c0_56] : memref<1x4x8x128xf32, #tpu.memory_space<vmem>>, vector<1x1x8x128xf32>
    %182 = vector.shape_cast %181 : vector<1x1x8x128xf32> to vector<8x128xf32>
    %183 = vector.shape_cast %180 : vector<8x128xf32> to vector<1x1x8x128xf32>
    tpu.vector_store %arg5[%c0_53, %c1_54, %c0_55, %c0_56], %183 {strides = array<i32>} : memref<1x4x8x128xf32, #tpu.memory_space<vmem>>, vector<1x1x8x128xf32>,
    %c0_57 = arith.constant 0 : index
    %c2_58 = arith.constant 2 : index
    %c0_59 = arith.constant 0 : index
    %c0_60 = arith.constant 0 : index
    %c0_61 = arith.constant 0 : index
    %184 = vector.load %arg2[%c0_57, %c2_58, %c0_59, %c0_60, %c0_61] : memref<1x4x4x8x128xf32, #tpu.memory_space<vmem>>, vector<1x1x1x8x128xf32>
    %185 = vector.shape_cast %184 : vector<1x1x1x8x128xf32> to vector<8x128xf32>
    %c0_62 = arith.constant 0 : index
    %c2_63 = arith.constant 2 : index
    %c1_64 = arith.constant 1 : index
    %c0_65 = arith.constant 0 : index
    %c0_66 = arith.constant 0 : index
    %186 = vector.load %arg2[%c0_62, %c2_63, %c1_64, %c0_65, %c0_66] : memref<1x4x4x8x128xf32, #tpu.memory_space<vmem>>, vector<1x1x1x8x128xf32>
    %187 = vector.shape_cast %186 : vector<1x1x1x8x128xf32> to vector<8x128xf32>
    %c0_67 = arith.constant 0 : index
    %c2_68 = arith.constant 2 : index
    %c2_69 = arith.constant 2 : index
    %c0_70 = arith.constant 0 : index
    %c0_71 = arith.constant 0 : index
    %188 = vector.load %arg2[%c0_67, %c2_68, %c2_69, %c0_70, %c0_71] : memref<1x4x4x8x128xf32, #tpu.memory_space<vmem>>, vector<1x1x1x8x128xf32>
    %189 = vector.shape_cast %188 : vector<1x1x1x8x128xf32> to vector<8x128xf32>
    %c0_72 = arith.constant 0 : index
    %c2_73 = arith.constant 2 : index
    %c3_74 = arith.constant 3 : index
    %c0_75 = arith.constant 0 : index
    %c0_76 = arith.constant 0 : index
    %190 = vector.load %arg2[%c0_72, %c2_73, %c3_74, %c0_75, %c0_76] : memref<1x4x4x8x128xf32, #tpu.memory_space<vmem>>, vector<1x1x1x8x128xf32>
    %191 = vector.shape_cast %190 : vector<1x1x1x8x128xf32> to vector<8x128xf32>
    %c32 = arith.constant 32 : index
    %192 = memref.load %arg3[%c32] : memref<64xf32, #tpu.memory_space<smem>>
    %193 = vector.broadcast %192 : f32 to vector<8x128xf32>
    %194 = arith.mulf %193, %185 : vector<8x128xf32>
    %c33 = arith.constant 33 : index
    %195 = memref.load %arg3[%c33] : memref<64xf32, #tpu.memory_space<smem>>
    %196 = vector.broadcast %195 : f32 to vector<8x128xf32>
    %197 = arith.mulf %196, %187 : vector<8x128xf32>
    %198 = arith.addf %194, %197 : vector<8x128xf32>
    %c34 = arith.constant 34 : index
    %199 = memref.load %arg3[%c34] : memref<64xf32, #tpu.memory_space<smem>>
    %200 = vector.broadcast %199 : f32 to vector<8x128xf32>
    %201 = arith.mulf %200, %189 : vector<8x128xf32>
    %202 = arith.addf %198, %201 : vector<8x128xf32>
    %c35 = arith.constant 35 : index
    %203 = memref.load %arg3[%c35] : memref<64xf32, #tpu.memory_space<smem>>
    %204 = vector.broadcast %203 : f32 to vector<8x128xf32>
    %205 = arith.mulf %204, %191 : vector<8x128xf32>
    %206 = arith.addf %202, %205 : vector<8x128xf32>
    %c8_77 = arith.constant 8 : index
    %207 = memref.load %arg4[%c8_77] : memref<16xf32, #tpu.memory_space<smem>>
    %208 = vector.broadcast %207 : f32 to vector<8x128xf32>
    %209 = arith.addf %206, %208 : vector<8x128xf32>
    %210 = math.cos %209 : vector<8x128xf32>
    %c36 = arith.constant 36 : index
    %211 = memref.load %arg3[%c36] : memref<64xf32, #tpu.memory_space<smem>>
    %212 = vector.broadcast %211 : f32 to vector<8x128xf32>
    %213 = arith.mulf %212, %185 : vector<8x128xf32>
    %c37 = arith.constant 37 : index
    %214 = memref.load %arg3[%c37] : memref<64xf32, #tpu.memory_space<smem>>
    %215 = vector.broadcast %214 : f32 to vector<8x128xf32>
    %216 = arith.mulf %215, %187 : vector<8x128xf32>
    %217 = arith.addf %213, %216 : vector<8x128xf32>
    %c38 = arith.constant 38 : index
    %218 = memref.load %arg3[%c38] : memref<64xf32, #tpu.memory_space<smem>>
    %219 = vector.broadcast %218 : f32 to vector<8x128xf32>
    %220 = arith.mulf %219, %189 : vector<8x128xf32>
    %221 = arith.addf %217, %220 : vector<8x128xf32>
    %c39 = arith.constant 39 : index
    %222 = memref.load %arg3[%c39] : memref<64xf32, #tpu.memory_space<smem>>
    %223 = vector.broadcast %222 : f32 to vector<8x128xf32>
    %224 = arith.mulf %223, %191 : vector<8x128xf32>
    %225 = arith.addf %221, %224 : vector<8x128xf32>
    %c9_78 = arith.constant 9 : index
    %226 = memref.load %arg4[%c9_78] : memref<16xf32, #tpu.memory_space<smem>>
    %227 = vector.broadcast %226 : f32 to vector<8x128xf32>
    %228 = arith.addf %225, %227 : vector<8x128xf32>
    %229 = math.cos %228 : vector<8x128xf32>
    %230 = arith.addf %210, %229 : vector<8x128xf32>
    %c40 = arith.constant 40 : index
    %231 = memref.load %arg3[%c40] : memref<64xf32, #tpu.memory_space<smem>>
    %232 = vector.broadcast %231 : f32 to vector<8x128xf32>
    %233 = arith.mulf %232, %185 : vector<8x128xf32>
    %c41 = arith.constant 41 : index
    %234 = memref.load %arg3[%c41] : memref<64xf32, #tpu.memory_space<smem>>
    %235 = vector.broadcast %234 : f32 to vector<8x128xf32>
    %236 = arith.mulf %235, %187 : vector<8x128xf32>
    %237 = arith.addf %233, %236 : vector<8x128xf32>
    %c42 = arith.constant 42 : index
    %238 = memref.load %arg3[%c42] : memref<64xf32, #tpu.memory_space<smem>>
    %239 = vector.broadcast %238 : f32 to vector<8x128xf32>
    %240 = arith.mulf %239, %189 : vector<8x128xf32>
    %241 = arith.addf %237, %240 : vector<8x128xf32>
    %c43 = arith.constant 43 : index
    %242 = memref.load %arg3[%c43] : memref<64xf32, #tpu.memory_space<smem>>
    %243 = vector.broadcast %242 : f32 to vector<8x128xf32>
    %244 = arith.mulf %243, %191 : vector<8x128xf32>
    %245 = arith.addf %241, %244 : vector<8x128xf32>
    %c10_79 = arith.constant 10 : index
    %246 = memref.load %arg4[%c10_79] : memref<16xf32, #tpu.memory_space<smem>>
    %247 = vector.broadcast %246 : f32 to vector<8x128xf32>
    %248 = arith.addf %245, %247 : vector<8x128xf32>
    %249 = math.cos %248 : vector<8x128xf32>
    %250 = arith.addf %230, %249 : vector<8x128xf32>
    %c44 = arith.constant 44 : index
    %251 = memref.load %arg3[%c44] : memref<64xf32, #tpu.memory_space<smem>>
    %252 = vector.broadcast %251 : f32 to vector<8x128xf32>
    %253 = arith.mulf %252, %185 : vector<8x128xf32>
    %c45 = arith.constant 45 : index
    %254 = memref.load %arg3[%c45] : memref<64xf32, #tpu.memory_space<smem>>
    %255 = vector.broadcast %254 : f32 to vector<8x128xf32>
    %256 = arith.mulf %255, %187 : vector<8x128xf32>
    %257 = arith.addf %253, %256 : vector<8x128xf32>
    %c46 = arith.constant 46 : index
    %258 = memref.load %arg3[%c46] : memref<64xf32, #tpu.memory_space<smem>>
    %259 = vector.broadcast %258 : f32 to vector<8x128xf32>
    %260 = arith.mulf %259, %189 : vector<8x128xf32>
    %261 = arith.addf %257, %260 : vector<8x128xf32>
    %c47 = arith.constant 47 : index
    %262 = memref.load %arg3[%c47] : memref<64xf32, #tpu.memory_space<smem>>
    %263 = vector.broadcast %262 : f32 to vector<8x128xf32>
    %264 = arith.mulf %263, %191 : vector<8x128xf32>
    %265 = arith.addf %261, %264 : vector<8x128xf32>
    %c11_80 = arith.constant 11 : index
    %266 = memref.load %arg4[%c11_80] : memref<16xf32, #tpu.memory_space<smem>>
    %267 = vector.broadcast %266 : f32 to vector<8x128xf32>
    %268 = arith.addf %265, %267 : vector<8x128xf32>
    %269 = math.cos %268 : vector<8x128xf32>
    %270 = arith.addf %250, %269 : vector<8x128xf32>
    %cst_81 = arith.constant 2.500000e-01 : f32
    %271 = vector.broadcast %cst_81 : f32 to vector<8x128xf32>
    %272 = arith.mulf %270, %271 : vector<8x128xf32>
    %c0_82 = arith.constant 0 : index
    %c2_83 = arith.constant 2 : index
    %c0_84 = arith.constant 0 : index
    %c0_85 = arith.constant 0 : index
    %273 = vector.load %arg5[%c0_82, %c2_83, %c0_84, %c0_85] : memref<1x4x8x128xf32, #tpu.memory_space<vmem>>, vector<1x1x8x128xf32>
    %274 = vector.shape_cast %273 : vector<1x1x8x128xf32> to vector<8x128xf32>
    %275 = vector.shape_cast %272 : vector<8x128xf32> to vector<1x1x8x128xf32>
    tpu.vector_store %arg5[%c0_82, %c2_83, %c0_84, %c0_85], %275 {strides = array<i32>} : memref<1x4x8x128xf32, #tpu.memory_space<vmem>>, vector<1x1x8x128xf32>,
    %c0_86 = arith.constant 0 : index
    %c3_87 = arith.constant 3 : index
    %c0_88 = arith.constant 0 : index
    %c0_89 = arith.constant 0 : index
    %c0_90 = arith.constant 0 : index
    %276 = vector.load %arg2[%c0_86, %c3_87, %c0_88, %c0_89, %c0_90] : memref<1x4x4x8x128xf32, #tpu.memory_space<vmem>>, vector<1x1x1x8x128xf32>
    %277 = vector.shape_cast %276 : vector<1x1x1x8x128xf32> to vector<8x128xf32>
    %c0_91 = arith.constant 0 : index
    %c3_92 = arith.constant 3 : index
    %c1_93 = arith.constant 1 : index
    %c0_94 = arith.constant 0 : index
    %c0_95 = arith.constant 0 : index
    %278 = vector.load %arg2[%c0_91, %c3_92, %c1_93, %c0_94, %c0_95] : memref<1x4x4x8x128xf32, #tpu.memory_space<vmem>>, vector<1x1x1x8x128xf32>
    %279 = vector.shape_cast %278 : vector<1x1x1x8x128xf32> to vector<8x128xf32>
    %c0_96 = arith.constant 0 : index
    %c3_97 = arith.constant 3 : index
    %c2_98 = arith.constant 2 : index
    %c0_99 = arith.constant 0 : index
    %c0_100 = arith.constant 0 : index
    %280 = vector.load %arg2[%c0_96, %c3_97, %c2_98, %c0_99, %c0_100] : memref<1x4x4x8x128xf32, #tpu.memory_space<vmem>>, vector<1x1x1x8x128xf32>
    %281 = vector.shape_cast %280 : vector<1x1x1x8x128xf32> to vector<8x128xf32>
    %c0_101 = arith.constant 0 : index
    %c3_102 = arith.constant 3 : index
    %c3_103 = arith.constant 3 : index
    %c0_104 = arith.constant 0 : index
    %c0_105 = arith.constant 0 : index
    %282 = vector.load %arg2[%c0_101, %c3_102, %c3_103, %c0_104, %c0_105] : memref<1x4x4x8x128xf32, #tpu.memory_space<vmem>>, vector<1x1x1x8x128xf32>
    %283 = vector.shape_cast %282 : vector<1x1x1x8x128xf32> to vector<8x128xf32>
    %c48 = arith.constant 48 : index
    %284 = memref.load %arg3[%c48] : memref<64xf32, #tpu.memory_space<smem>>
    %285 = vector.broadcast %284 : f32 to vector<8x128xf32>
    %286 = arith.mulf %285, %277 : vector<8x128xf32>
    %c49 = arith.constant 49 : index
    %287 = memref.load %arg3[%c49] : memref<64xf32, #tpu.memory_space<smem>>
    %288 = vector.broadcast %287 : f32 to vector<8x128xf32>
    %289 = arith.mulf %288, %279 : vector<8x128xf32>
    %290 = arith.addf %286, %289 : vector<8x128xf32>
    %c50 = arith.constant 50 : index
    %291 = memref.load %arg3[%c50] : memref<64xf32, #tpu.memory_space<smem>>
    %292 = vector.broadcast %291 : f32 to vector<8x128xf32>
    %293 = arith.mulf %292, %281 : vector<8x128xf32>
    %294 = arith.addf %290, %293 : vector<8x128xf32>
    %c51 = arith.constant 51 : index
    %295 = memref.load %arg3[%c51] : memref<64xf32, #tpu.memory_space<smem>>
    %296 = vector.broadcast %295 : f32 to vector<8x128xf32>
    %297 = arith.mulf %296, %283 : vector<8x128xf32>
    %298 = arith.addf %294, %297 : vector<8x128xf32>
    %c12_106 = arith.constant 12 : index
    %299 = memref.load %arg4[%c12_106] : memref<16xf32, #tpu.memory_space<smem>>
    %300 = vector.broadcast %299 : f32 to vector<8x128xf32>
    %301 = arith.addf %298, %300 : vector<8x128xf32>
    %302 = math.cos %301 : vector<8x128xf32>
    %c52 = arith.constant 52 : index
    %303 = memref.load %arg3[%c52] : memref<64xf32, #tpu.memory_space<smem>>
    %304 = vector.broadcast %303 : f32 to vector<8x128xf32>
    %305 = arith.mulf %304, %277 : vector<8x128xf32>
    %c53 = arith.constant 53 : index
    %306 = memref.load %arg3[%c53] : memref<64xf32, #tpu.memory_space<smem>>
    %307 = vector.broadcast %306 : f32 to vector<8x128xf32>
    %308 = arith.mulf %307, %279 : vector<8x128xf32>
    %309 = arith.addf %305, %308 : vector<8x128xf32>
    %c54 = arith.constant 54 : index
    %310 = memref.load %arg3[%c54] : memref<64xf32, #tpu.memory_space<smem>>
    %311 = vector.broadcast %310 : f32 to vector<8x128xf32>
    %312 = arith.mulf %311, %281 : vector<8x128xf32>
    %313 = arith.addf %309, %312 : vector<8x128xf32>
    %c55 = arith.constant 55 : index
    %314 = memref.load %arg3[%c55] : memref<64xf32, #tpu.memory_space<smem>>
    %315 = vector.broadcast %314 : f32 to vector<8x128xf32>
    %316 = arith.mulf %315, %283 : vector<8x128xf32>
    %317 = arith.addf %313, %316 : vector<8x128xf32>
    %c13_107 = arith.constant 13 : index
    %318 = memref.load %arg4[%c13_107] : memref<16xf32, #tpu.memory_space<smem>>
    %319 = vector.broadcast %318 : f32 to vector<8x128xf32>
    %320 = arith.addf %317, %319 : vector<8x128xf32>
    %321 = math.cos %320 : vector<8x128xf32>
    %322 = arith.addf %302, %321 : vector<8x128xf32>
    %c56 = arith.constant 56 : index
    %323 = memref.load %arg3[%c56] : memref<64xf32, #tpu.memory_space<smem>>
    %324 = vector.broadcast %323 : f32 to vector<8x128xf32>
    %325 = arith.mulf %324, %277 : vector<8x128xf32>
    %c57 = arith.constant 57 : index
    %326 = memref.load %arg3[%c57] : memref<64xf32, #tpu.memory_space<smem>>
    %327 = vector.broadcast %326 : f32 to vector<8x128xf32>
    %328 = arith.mulf %327, %279 : vector<8x128xf32>
    %329 = arith.addf %325, %328 : vector<8x128xf32>
    %c58 = arith.constant 58 : index
    %330 = memref.load %arg3[%c58] : memref<64xf32, #tpu.memory_space<smem>>
    %331 = vector.broadcast %330 : f32 to vector<8x128xf32>
    %332 = arith.mulf %331, %281 : vector<8x128xf32>
    %333 = arith.addf %329, %332 : vector<8x128xf32>
    %c59 = arith.constant 59 : index
    %334 = memref.load %arg3[%c59] : memref<64xf32, #tpu.memory_space<smem>>
    %335 = vector.broadcast %334 : f32 to vector<8x128xf32>
    %336 = arith.mulf %335, %283 : vector<8x128xf32>
    %337 = arith.addf %333, %336 : vector<8x128xf32>
    %c14_108 = arith.constant 14 : index
    %338 = memref.load %arg4[%c14_108] : memref<16xf32, #tpu.memory_space<smem>>
    %339 = vector.broadcast %338 : f32 to vector<8x128xf32>
    %340 = arith.addf %337, %339 : vector<8x128xf32>
    %341 = math.cos %340 : vector<8x128xf32>
    %342 = arith.addf %322, %341 : vector<8x128xf32>
    %c60 = arith.constant 60 : index
    %343 = memref.load %arg3[%c60] : memref<64xf32, #tpu.memory_space<smem>>
    %344 = vector.broadcast %343 : f32 to vector<8x128xf32>
    %345 = arith.mulf %344, %277 : vector<8x128xf32>
    %c61 = arith.constant 61 : index
    %346 = memref.load %arg3[%c61] : memref<64xf32, #tpu.memory_space<smem>>
    %347 = vector.broadcast %346 : f32 to vector<8x128xf32>
    %348 = arith.mulf %347, %279 : vector<8x128xf32>
    %349 = arith.addf %345, %348 : vector<8x128xf32>
    %c62 = arith.constant 62 : index
    %350 = memref.load %arg3[%c62] : memref<64xf32, #tpu.memory_space<smem>>
    %351 = vector.broadcast %350 : f32 to vector<8x128xf32>
    %352 = arith.mulf %351, %281 : vector<8x128xf32>
    %353 = arith.addf %349, %352 : vector<8x128xf32>
    %c63 = arith.constant 63 : index
    %354 = memref.load %arg3[%c63] : memref<64xf32, #tpu.memory_space<smem>>
    %355 = vector.broadcast %354 : f32 to vector<8x128xf32>
    %356 = arith.mulf %355, %283 : vector<8x128xf32>
    %357 = arith.addf %353, %356 : vector<8x128xf32>
    %c15_109 = arith.constant 15 : index
    %358 = memref.load %arg4[%c15_109] : memref<16xf32, #tpu.memory_space<smem>>
    %359 = vector.broadcast %358 : f32 to vector<8x128xf32>
    %360 = arith.addf %357, %359 : vector<8x128xf32>
    %361 = math.cos %360 : vector<8x128xf32>
    %362 = arith.addf %342, %361 : vector<8x128xf32>
    %cst_110 = arith.constant 2.500000e-01 : f32
    %363 = vector.broadcast %cst_110 : f32 to vector<8x128xf32>
    %364 = arith.mulf %362, %363 : vector<8x128xf32>
    %c0_111 = arith.constant 0 : index
    %c3_112 = arith.constant 3 : index
    %c0_113 = arith.constant 0 : index
    %c0_114 = arith.constant 0 : index
    %365 = vector.load %arg5[%c0_111, %c3_112, %c0_113, %c0_114] : memref<1x4x8x128xf32, #tpu.memory_space<vmem>>, vector<1x1x8x128xf32>
    %366 = vector.shape_cast %365 : vector<1x1x8x128xf32> to vector<8x128xf32>
    %367 = vector.shape_cast %364 : vector<8x128xf32> to vector<1x1x8x128xf32>
    tpu.vector_store %arg5[%c0_111, %c3_112, %c0_113, %c0_114], %367 {strides = array<i32>} : memref<1x4x8x128xf32, #tpu.memory_space<vmem>>, vector<1x1x8x128xf32>,
    return
  }
  func.func @transform_0(%arg0: i32, %arg1: i32) -> (i32, i32, i32, i32, i32) {
    %c0_i32 = arith.constant 0 : i32
    %c0_i32_0 = arith.constant 0 : i32
    %c0_i32_1 = arith.constant 0 : i32
    %c0_i32_2 = arith.constant 0 : i32
    return %arg0, %c0_i32, %c0_i32_0, %arg1, %c0_i32_1 : i32, i32, i32, i32, i32
  }
  func.func @transform_1(%arg0: i32, %arg1: i32) -> i32 {
    %c0_i32 = arith.constant 0 : i32
    %c0_i32_0 = arith.constant 0 : i32
    return %c0_i32 : i32
  }
  func.func @transform_2(%arg0: i32, %arg1: i32) -> i32 {
    %c0_i32 = arith.constant 0 : i32
    %c0_i32_0 = arith.constant 0 : i32
    return %c0_i32 : i32
  }
  func.func @transform_3(%arg0: i32, %arg1: i32) -> (i32, i32, i32, i32) {
    %c0_i32 = arith.constant 0 : i32
    %c0_i32_0 = arith.constant 0 : i32
    %c0_i32_1 = arith.constant 0 : i32
    return %arg0, %c0_i32, %arg1, %c0_i32_0 : i32, i32, i32, i32
  }
}

</mosaic_0001>

<llo_original>
// kernel: quconv2d_mc_forward.1
$region0: #{quconv2d_mc_forward.1}
  #allocation0 [shape = 'u32[]', space=smem, size = 0x4, offset = 0x4, fixed_abs, tag = 'smem constant byte address 0x4 - core index']
  #allocation1 [shape = 'u32[144,128]{1,0:T(1,128)}', space=vmem, size = 0x12000, scoped, tag = 'internal scratch']
  %s0 = inlined_call_operand.vmem [shape: f32[2,4,4,8,128], index: 0, kind: input, shape index: {}]
  %s1 = inlined_call_operand.vmem [shape: f32[64], index: 1, kind: input, shape index: {}]
  %s2 = inlined_call_operand.vmem [shape: f32[16], index: 2, kind: input, shape index: {}]
  %s3 = inlined_call_operand.vmem [shape: f32[2,4,8,128], index: 3, kind: output, shape index: {}]
  %s4 = sld [smem:[#allocation0]]
  $region53: #{quconv2d_mc_forward.1} parent=0
    _
  %s6 = ssub.s32 1, %s4
  %s7 = scalar_select 0, %s6, %s4
  $region1: #{quconv2d_mc_forward.1} parent=0
    #allocation2 [shape = 'u8[512]{0}', space=smem, size = 0x200, scoped, tag = 'input window, operand 1, single buffered']
    #allocation3 [shape = 's32[2]{0}', space=sflag, size = 0x8, scoped, tag = 'scoped memory for quconv2d_mc_forward.1']
    #allocation4 [shape = 'u8[512]{0}', space=smem, size = 0x200, scoped, tag = 'input window, operand 2, single buffered']
    #allocation5 [shape = 's32[1]{0}', space=sflag, size = 0x4, scoped, tag = 'scoped memory for quconv2d_mc_forward.1']
    %8 = vsyncpa [#allocation3], 0
    %9 = vsyncpa [#allocation5], 0
    loop: start=0, step=1, limit=4
    $region2: #{quconv2d_mc_forward.1} parent=1 // loop_pre_header
      _
    $region3: #{quconv2d_mc_forward.1} parent=1 // loop_header
      %s11 = sphi 0, %s15
      %p12 = scmp.ge.s32.totalorder %s11, 4
      %s18 = sphi 0, %s30
      %s19 = sphi 0, %s26
      %s20 = sphi 0, %s18
      %s21 = sphi 0, %s19
      %s22 = sphi 0, %s20
      %s23 = sphi 0, %s21
      %s35 = sphi 0, %s37
      %s38 = sphi 0, %s35
      %s39 = sphi 0, %s38
      %s55 = sphi 0, %s39
      %s59 = sphi 0, %s59
      %s61 = sphi 0, %s59
      %s62 = sphi 0, %s61
      %s76 = sphi 0, %s62
      %s80 = sphi 0, %s80
      %s82 = sphi 0, %s80
      %s83 = sphi 0, %s82
      %s97 = sphi 0, %s83
      %s105 = sphi 0, %s107
      %s108 = sphi 0, %s105
      %s109 = sphi 0, %s108
      %s125 = sphi 0, %s109
    $region4: #{quconv2d_mc_forward.1} parent=1 // loop_header_branch
      %14 = sbr.rel (%p12) target = $region8
    $region5: #{quconv2d_mc_forward.1} parent=1 // loop_body
      %s16 = ssub.s32 %s11, 1
      %s17 = ssub.s32 %s11, 2
      %s24 = sadd.s32 1, %s19
      %p25 = scmp.ge.s32.totalorder %s24, 1
      %s26 = scalar_select %p25, 0, %s24
      %s27 = sadd.s32 1, %s18
      %s28 = scalar_select %p25, %s27, %s18
      %p29 = scmp.ge.s32.totalorder %s28, 2
      %s30 = scalar_select %p29, 0, %s28
      %s31 = ssub.s32 %s18, %s30
      %s32 = ssub.s32 %s19, %s26
      %s33 = sor.u32 %s31, %s32
      %p34 = scmp.eq.s32.totalorder %s33, 0
      %s36 = sadd.s32 %s35, 1
      %s37 = scalar_select %p34, %s35, %s36
      %p40 = pneg %p34
      %p41 = scmp.eq.s32.totalorder %s11, 1
      %p42 = por %p40, %p41
      %p43 = scmp.ne.s32.totalorder %s35, %s38
      %p44 = scmp.eq.s32.totalorder %s11, 0
      %p45 = por %p43, %p44
      %p46 = scmp.ne.s32.totalorder %s35, %s38
      %p47 = scmp.eq.s32.totalorder %s16, 1
      %p48 = por %p46, %p47
      %p49 = scmp.ne.s32.totalorder %s38, %s39
      %p50 = scmp.eq.s32.totalorder %s16, 0
      %p51 = por %p49, %p50
      %p52 = scmp.ne.s32.totalorder %s38, %s39
      %p53 = scmp.eq.s32.totalorder %s17, 1
      %p54 = por %p52, %p53
      %p56 = scmp.ne.s32.totalorder %s39, %s55
      %p57 = scmp.eq.s32.totalorder %s17, 0
      %p58 = por %p56, %p57
      %s60 = sadd.s32 %s59, 1
      %p63 = scmp.eq.s32.totalorder %s11, 1
      %p64 = scmp.ne.s32.totalorder %s59, %s61
      %p65 = scmp.eq.s32.totalorder %s11, 0
      %p66 = por %p64, %p65
      %p67 = scmp.ne.s32.totalorder %s59, %s61
      %p68 = scmp.eq.s32.totalorder %s16, 1
      %p69 = por %p67, %p68
      %p70 = scmp.ne.s32.totalorder %s61, %s62
      %p71 = scmp.eq.s32.totalorder %s16, 0
      %p72 = por %p70, %p71
      %p73 = scmp.ne.s32.totalorder %s61, %s62
      %p74 = scmp.eq.s32.totalorder %s17, 1
      %p75 = por %p73, %p74
      %p77 = scmp.ne.s32.totalorder %s62, %s76
      %p78 = scmp.eq.s32.totalorder %s17, 0
      %p79 = por %p77, %p78
      %s81 = sadd.s32 %s80, 1
      %p84 = scmp.eq.s32.totalorder %s11, 1
      %p85 = scmp.ne.s32.totalorder %s80, %s82
      %p86 = scmp.eq.s32.totalorder %s11, 0
      %p87 = por %p85, %p86
      %p88 = scmp.ne.s32.totalorder %s80, %s82
      %p89 = scmp.eq.s32.totalorder %s16, 1
      %p90 = por %p88, %p89
      %p91 = scmp.ne.s32.totalorder %s82, %s83
      %p92 = scmp.eq.s32.totalorder %s16, 0
      %p93 = por %p91, %p92
      %p94 = scmp.ne.s32.totalorder %s82, %s83
      %p95 = scmp.eq.s32.totalorder %s17, 1
      %p96 = por %p94, %p95
      %p98 = scmp.ne.s32.totalorder %s83, %s97
      %p99 = scmp.eq.s32.totalorder %s17, 0
      %p100 = por %p98, %p99
      %s101 = ssub.s32 %s18, %s30
      %s102 = ssub.s32 %s19, %s26
      %s103 = sor.u32 %s101, %s102
      %p104 = scmp.eq.s32.totalorder %s103, 0
      %s106 = sadd.s32 %s105, 1
      %s107 = scalar_select %p104, %s105, %s106
      %p110 = pneg %p104
      %p111 = scmp.eq.s32.totalorder %s11, 1
      %p112 = por %p110, %p111
      %p113 = scmp.ne.s32.totalorder %s105, %s108
      %p114 = scmp.eq.s32.totalorder %s11, 0
      %p115 = por %p113, %p114
      %p116 = scmp.ne.s32.totalorder %s105, %s108
      %p117 = scmp.eq.s32.totalorder %s16, 1
      %p118 = por %p116, %p117
      %p119 = scmp.ne.s32.totalorder %s108, %s109
      %p120 = scmp.eq.s32.totalorder %s16, 0
      %p121 = por %p119, %p120
      %p122 = scmp.ne.s32.totalorder %s108, %s109
      %p123 = scmp.eq.s32.totalorder %s17, 1
      %p124 = por %p122, %p123
      %p126 = scmp.ne.s32.totalorder %s109, %s125
      %p127 = scmp.eq.s32.totalorder %s17, 0
      %p128 = por %p126, %p127
      %p129 = scmp.le.s32.totalorder 1, %s11
      %p130 = scmp.lt.s32.totalorder %s11, 3
      %p131 = pnand %p129, %p130
      %p132 = pneg %p131
      // Predicated region
      $region9: #{quconv2d_mc_forward.1} parent=5 // pred_check
        _
      $region10: #{quconv2d_mc_forward.1} parent=5 // pred_check_branch
        %134 = sbr.rel (%p131) target = $region12
      $region11: #{quconv2d_mc_forward.1} parent=5 // pred_region
        %s135 = ssub.s32 %s11, 1
        // Predicated region
        $region13: #{quconv2d_mc_forward.1} parent=11 // pred_check
          %p136 = pneg %p72
        $region14: #{quconv2d_mc_forward.1} parent=11 // pred_check_branch
          %138 = sbr.rel (%p136) target = $region16
        $region15: #{quconv2d_mc_forward.1} parent=11 // pred_region
          %s140 = ssub.s32 16, 16
          %141 = vsyncadd [#allocation3], %s140
          %s143 = sshll.u32 %s1, 4
          %s144 = int_to_ptr.vmem [resolvable:$true] %s143
          %146 = dma.vmem_to_smem %s144, 16, [#allocation2], [#allocation3]
        $region16: #{quconv2d_mc_forward.1} parent=11 // pred_fallthru
          _
        // Predicated region
        $region17: #{quconv2d_mc_forward.1} parent=11 // pred_check
          %p147 = pneg %p93
        $region18: #{quconv2d_mc_forward.1} parent=11 // pred_check_branch
          %149 = sbr.rel (%p147) target = $region20
        $region19: #{quconv2d_mc_forward.1} parent=11 // pred_region
          %s151 = ssub.s32 16, 16
          %152 = vsyncadd [#allocation5], %s151
          %s154 = sshll.u32 %s2, 4
          %s155 = int_to_ptr.vmem [resolvable:$true] %s154
          %157 = dma.vmem_to_smem %s155, 16, [#allocation4], [#allocation5]
        $region20: #{quconv2d_mc_forward.1} parent=11 // pred_fallthru
          _
      $region12: #{quconv2d_mc_forward.1} parent=5 // pred_fallthru
        _
      %p158 = scmp.lt.s32.totalorder %s11, 2
      // Predicated region
      $region21: #{quconv2d_mc_forward.1} parent=5 // pred_check
        %p159 = pneg %p158
      $region22: #{quconv2d_mc_forward.1} parent=5 // pred_check_branch
        %161 = sbr.rel (%p159) target = $region24
      $region23: #{quconv2d_mc_forward.1} parent=5 // pred_region
        // Predicated region
        $region25: #{quconv2d_mc_forward.1} parent=23 // pred_check
          %p162 = pneg %p45
        $region26: #{quconv2d_mc_forward.1} parent=23 // pred_check_branch
          %164 = sbr.rel (%p162) target = $region28
        $region27: #{quconv2d_mc_forward.1} parent=23 // pred_region
          %p165 = scmp.lt.s32.totalorder %s18, 1
          %s166 = scalar_select %p165, %s18, 1
          %p167 = scmp.lt.s32.totalorder %s19, 0
          %s168 = scalar_select %p167, %s19, 0
          %s169 = smul.addr %s166, 16
          %s170 = sadd.s32 %s168, %s169
          %s171 = smul.addr %s170, 8
          %s172 = scalar_lea.vmem %s0, %s171
        $region28: #{quconv2d_mc_forward.1} parent=23 // pred_fallthru
          _
      $region24: #{quconv2d_mc_forward.1} parent=5 // pred_fallthru
        _
      %p173 = scmp.le.s32.totalorder 1, %s11
      %p174 = scmp.lt.s32.totalorder %s11, 3
      %p175 = pnand %p173, %p174
      %p176 = pneg %p175
      // Predicated region
      $region29: #{quconv2d_mc_forward.1} parent=5 // pred_check
        _
      $region30: #{quconv2d_mc_forward.1} parent=5 // pred_check_branch
        %178 = sbr.rel (%p175) target = $region32
      $region31: #{quconv2d_mc_forward.1} parent=5 // pred_region
        %s179 = ssub.s32 %s11, 1
        // Predicated region
        $region33: #{quconv2d_mc_forward.1} parent=31 // pred_check
          %p180 = pneg %p72
        $region34: #{quconv2d_mc_forward.1} parent=31 // pred_check_branch
          %182 = sbr.rel (%p180) target = $region36
        $region35: #{quconv2d_mc_forward.1} parent=31 // pred_region
          %183 = dma.done [#allocation3], 16
        $region36: #{quconv2d_mc_forward.1} parent=31 // pred_fallthru
          _
        // Predicated region
        $region37: #{quconv2d_mc_forward.1} parent=31 // pred_check
          %p184 = pneg %p93
        $region38: #{quconv2d_mc_forward.1} parent=31 // pred_check_branch
          %186 = sbr.rel (%p184) target = $region40
        $region39: #{quconv2d_mc_forward.1} parent=31 // pred_region
          %187 = dma.done [#allocation5], 16
        $region40: #{quconv2d_mc_forward.1} parent=31 // pred_fallthru
          _
        %188 = sfence
        %p189 = scmp.lt.s32.totalorder %s20, 1
        %s190 = scalar_select %p189, %s20, 1
        %p191 = scmp.lt.s32.totalorder %s21, 0
        %s192 = scalar_select %p191, %s21, 0
        %s193 = smul.addr %s190, 16
        %s194 = sadd.s32 %s192, %s193
        %s195 = smul.addr %s194, 8
        %s196 = scalar_lea.vmem %s0, %s195
        %p197 = pneg %p51
        %p198 = pneg %p48
        %p199 = pneg %p72
        %p200 = pneg %p69
        %p201 = pneg %p93
        %p202 = pneg %p90
        %p203 = pneg %p121
        %p204 = pneg %p118
        %p205 = scmp.lt.s32.totalorder %s20, 1
        %s206 = scalar_select %p205, %s20, 1
        %p207 = scmp.lt.s32.totalorder %s21, 0
        %s208 = scalar_select %p207, %s21, 0
        %s209 = smul.addr %s206, 4
        %s210 = sadd.s32 %s208, %s209
        %s211 = smul.addr %s210, 8
        %s212 = scalar_lea.vmem %s3, %s211
        %p213 = scmp.lt.s32.totalorder %s20, 1
        %s214 = scalar_select %p213, %s20, 1
        %p215 = scmp.lt.s32.totalorder %s21, 0
        %s216 = scalar_select %p215, %s21, 0
        %s217 = smul.addr %s214, 16
        %s218 = sadd.s32 %s216, %s217
        %s219 = smul.addr %s218, 8
        %s220 = scalar_lea.vmem %s0, %s219
        %p221 = scmp.lt.s32.totalorder %s20, 1
        %s222 = scalar_select %p221, %s20, 1
        %p223 = scmp.lt.s32.totalorder %s21, 0
        %s224 = scalar_select %p223, %s21, 0
        %s225 = smul.addr %s222, 4
        %s226 = sadd.s32 %s224, %s225
        %s227 = smul.addr %s226, 8
        %s228 = scalar_lea.vmem %s3, %s227
        %v229 = vld [vmem:[%s220] sm:$0xff]
        %s230 = scalar_lea.vmem %s220, 8
        %v231 = vld [vmem:[%s230] sm:$0xff]
        %s232 = scalar_lea.vmem %s220, 16
        %v233 = vld [vmem:[%s232] sm:$0xff]
        %s234 = scalar_lea.vmem %s220, 24
        %v235 = vld [vmem:[%s234] sm:$0xff]
        %s236 = sld [smem:[#allocation2]]
        %v237 = vstv %s236
        %v238 = vmul.f32 %v237, %v229
        %s239 = sld [smem:[#allocation2 + $0x1]]
        %v240 = vstv %s239
        %v241 = vmul.f32 %v240, %v231
        %v242 = vadd.f32 %v238, %v241
        %s243 = sld [smem:[#allocation2 + $0x2]]
        %v244 = vstv %s243
        %v245 = vmul.f32 %v244, %v233
        %v246 = vadd.f32 %v242, %v245
        %s247 = sld [smem:[#allocation2 + $0x3]]
        %v248 = vstv %s247
        %v249 = vmul.f32 %v248, %v235
        %v250 = vadd.f32 %v246, %v249
        %s251 = sld [smem:[#allocation4]]
        %v252 = vstv %s251
        %v253 = vadd.f32 %v250, %v252
        %v254 = vand.u32 2147483647, %v253
        %vm255 = vcmp.le.f32.partialorder %v254, 0.7853982
        %vm256 = vcmp.lt.s32.totalorder %v253, 0
        %v257 = vand.u32 %v253, 2139095040
        %v258 = vshrl.u32 %v257, 23
        %v259 = vsub.s32 %v258, 127
        %v260 = vand.u32 2147483647, %v253
        %v261 = vand.u32 %v260, 8388607
        %v262 = vor.u32 %v261, 8388608
        %v263 = vsub.s32 0, %v262
        %v264 = vadd.s32 %v259, 1
        %vm265 = vcmp.gt.s32.totalorder %v264, 0
        %v266 = vsel %vm265, %v264, 0
        %v267 = vshrl.u32 %v266, 5
        %v268 = vand.u32 %v266, 31
        %v269 = vsub.s32 32, %v268
        %v270 = vshrl.u32 683565275, %v269
        %v271 = vshll.u32 683565275, %v268
        %v272 = vshrl.u32 2475754826, %v269
        %v273 = vor.u32 %v271, %v272
        %v274 = vshll.u32 2475754826, %v268
        %v275 = vshrl.u32 2131351028, %v269
        %v276 = vor.u32 %v274, %v275
        %v277 = vshll.u32 2131351028, %v268
        %v278 = vshrl.u32 2102212464, %v269
        %v279 = vor.u32 %v277, %v278
        %v280 = vshll.u32 2102212464, %v268
        %v281 = vshrl.u32 920167782, %v269
        %v282 = vor.u32 %v280, %v281
        %v283 = vshll.u32 920167782, %v268
        %v284 = vshrl.u32 1326507024, %v269
        %v285 = vor.u32 %v283, %v284
        %vm286 = vcmp.lt.s32.totalorder %v267, 1
        %vm287 = vcmp.lt.s32.totalorder %v267, 2
        %vm288 = vcmp.lt.s32.totalorder %v267, 3
        %vm289 = vcmp.lt.s32.totalorder %v267, 4
        %v290 = vsel %vm286, %v270, %v273
        %v291 = vsel %vm289, %v279, 2102212464
        %v292 = vsel %vm288, %v276, %v291
        %v293 = vsel %vm287, %v290, %v292
        %v294 = vsel %vm286, %v273, %v276
        %v295 = vsel %vm289, %v282, 920167782
        %v296 = vsel %vm288, %v279, %v295
        %v297 = vsel %vm287, %v294, %v296
        %v298 = vsel %vm286, %v276, %v279
        %v299 = vsel %vm289, %v285, 1326507024
        %v300 = vsel %vm288, %v282, %v299
        %v301 = vsel %vm287, %v298, %v300
        %v302 = vshll.u32 %v262, 8
        %v303 = vmul.u32.u64.compose %v302, %v301
        %v304 = vextract.low.u32 %v303
        %v305 = vextract.high.u32 %v303
        %v306 = vmul.u32.u64.compose %v302, %v297
        %v307 = vextract.low.u32 %v306
        %v308 = vextract.high.u32 %v306
        %v309 = vmul.u32 %v302, %v293
        %v310 = vadd.s32 %v305, %v307
        %vm311 = vc.u32 %v305, %v307
        %v312 = vadd.s32 %v308, 1
        %v313 = vsel %vm311, %v312, %v308
        %v314 = vadd.s32 %v309, %v313
        %v315 = vadd.s32 %v314, 536870912
        %v316 = vshrl.u32 %v315, 30
        %v317 = vshll.u32 %v316, 30
        %v318 = vsub.s32 %v314, %v317
        %vm319 = vcmp.lt.s32.totalorder %v318, 0
        %v320 = vsub.s32 0, %v318
        %v321 = vsel %vm319, %v320, %v318
        %v322 = vclz %v321
        %v323 = vsub.s32 %v322, 2
        %vm324 = vcmp.gt.s32.totalorder 0, %v323
        %v325 = vsel %vm324, 0, %v323
        %v326 = vsub.s32 32, %v325
        %v327 = vshll.u32 %v318, %v325
        %v328 = vshrl.u32 %v310, %v326
        %v329 = vor.u32 %v327, %v328
        %v330 = vsub.s32 4294967266, %v325
        %v331 = vadd.s32 %v330, 127
        %v332 = vshll.u32 %v331, 23
        %v333 = vor.u32 4788187, %v332
        %v334 = vand.u32 2147483647, %v333
        %v336 = vcvt.s32.f32 %v329
        %v337 = vmul.f32 %v336, %v334
        %v338 = vxor.u32 %v337, 2147483648
        %v339 = vsel %vm256, %v338, %v337
        %v340 = vsub.s32 4, %v316
        %v341 = vsel %vm256, %v340, %v316
        %v342 = vsel %vm255, %v253, %v339
        %v343 = vsel %vm255, 0, %v341
        %v344 = vcosq.f32.pop %v342
        %v345 = vsinq.f32.pop %v342
        %vm346 = vweird.f32 %v253
        %v347 = vand.u32 %v343, 3
        %vm348 = vcmp.lt.s32.totalorder %v347, 2
        %vm349 = vcmp.eq.s32.totalorder %v347, 0
        %v350 = vxor.u32 %v345, 2147483648
        %v351 = vsel %vm349, %v344, %v350
        %vm352 = vcmp.eq.s32.totalorder %v347, 2
        %v353 = vxor.u32 %v344, 2147483648
        %v354 = vsel %vm352, %v353, %v345
        %v355 = vsel %vm348, %v351, %v354
        %v356 = vsel %vm346, nan, %v355
        %s357 = sld [smem:[#allocation2 + $0x4]]
        %v358 = vstv %s357
        %v359 = vmul.f32 %v358, %v229
        %s360 = sld [smem:[#allocation2 + $0x5]]
        %v361 = vstv %s360
        %v362 = vmul.f32 %v361, %v231
        %v363 = vadd.f32 %v359, %v362
        %s364 = sld [smem:[#allocation2 + $0x6]]
        %v365 = vstv %s364
        %v366 = vmul.f32 %v365, %v233
        %v367 = vadd.f32 %v363, %v366
        %s368 = sld [smem:[#allocation2 + $0x7]]
        %v369 = vstv %s368
        %v370 = vmul.f32 %v369, %v235
        %v371 = vadd.f32 %v367, %v370
        %s372 = sld [smem:[#allocation4 + $0x1]]
        %v373 = vstv %s372
        %v374 = vadd.f32 %v371, %v373
        %v375 = vand.u32 2147483647, %v374
        %vm376 = vcmp.le.f32.partialorder %v375, 0.7853982
        %vm377 = vcmp.lt.s32.totalorder %v374, 0
        %v378 = vand.u32 %v374, 2139095040
        %v379 = vshrl.u32 %v378, 23
        %v380 = vsub.s32 %v379, 127
        %v381 = vand.u32 2147483647, %v374
        %v382 = vand.u32 %v381, 8388607
        %v383 = vor.u32 %v382, 8388608
        %v384 = vsub.s32 0, %v383
        %v385 = vadd.s32 %v380, 1
        %vm386 = vcmp.gt.s32.totalorder %v385, 0
        %v387 = vsel %vm386, %v385, 0
        %v388 = vshrl.u32 %v387, 5
        %v389 = vand.u32 %v387, 31
        %v390 = vsub.s32 32, %v389
        %v391 = vshrl.u32 683565275, %v390
        %v392 = vshll.u32 683565275, %v389
        %v393 = vshrl.u32 2475754826, %v390
        %v394 = vor.u32 %v392, %v393
        %v395 = vshll.u32 2475754826, %v389
        %v396 = vshrl.u32 2131351028, %v390
        %v397 = vor.u32 %v395, %v396
        %v398 = vshll.u32 2131351028, %v389
        %v399 = vshrl.u32 2102212464, %v390
        %v400 = vor.u32 %v398, %v399
        %v401 = vshll.u32 2102212464, %v389
        %v402 = vshrl.u32 920167782, %v390
        %v403 = vor.u32 %v401, %v402
        %v404 = vshll.u32 920167782, %v389
        %v405 = vshrl.u32 1326507024, %v390
        %v406 = vor.u32 %v404, %v405
        %vm407 = vcmp.lt.s32.totalorder %v388, 1
        %vm408 = vcmp.lt.s32.totalorder %v388, 2
        %vm409 = vcmp.lt.s32.totalorder %v388, 3
        %vm410 = vcmp.lt.s32.totalorder %v388, 4
        %v411 = vsel %vm407, %v391, %v394
        %v412 = vsel %vm410, %v400, 2102212464
        %v413 = vsel %vm409, %v397, %v412
        %v414 = vsel %vm408, %v411, %v413
        %v415 = vsel %vm407, %v394, %v397
        %v416 = vsel %vm410, %v403, 920167782
        %v417 = vsel %vm409, %v400, %v416
        %v418 = vsel %vm408, %v415, %v417
        %v419 = vsel %vm407, %v397, %v400
        %v420 = vsel %vm410, %v406, 1326507024
        %v421 = vsel %vm409, %v403, %v420
        %v422 = vsel %vm408, %v419, %v421
        %v423 = vshll.u32 %v383, 8
        %v424 = vmul.u32.u64.compose %v423, %v422
        %v425 = vextract.low.u32 %v424
        %v426 = vextract.high.u32 %v424
        %v427 = vmul.u32.u64.compose %v423, %v418
        %v428 = vextract.low.u32 %v427
        %v429 = vextract.high.u32 %v427
        %v430 = vmul.u32 %v423, %v414
        %v431 = vadd.s32 %v426, %v428
        %vm432 = vc.u32 %v426, %v428
        %v433 = vadd.s32 %v429, 1
        %v434 = vsel %vm432, %v433, %v429
        %v435 = vadd.s32 %v430, %v434
        %v436 = vadd.s32 %v435, 536870912
        %v437 = vshrl.u32 %v436, 30
        %v438 = vshll.u32 %v437, 30
        %v439 = vsub.s32 %v435, %v438
        %vm440 = vcmp.lt.s32.totalorder %v439, 0
        %v441 = vsub.s32 0, %v439
        %v442 = vsel %vm440, %v441, %v439
        %v443 = vclz %v442
        %v444 = vsub.s32 %v443, 2
        %vm445 = vcmp.gt.s32.totalorder 0, %v444
        %v446 = vsel %vm445, 0, %v444
        %v447 = vsub.s32 32, %v446
        %v448 = vshll.u32 %v439, %v446
        %v449 = vshrl.u32 %v431, %v447
        %v450 = vor.u32 %v448, %v449
        %v451 = vsub.s32 4294967266, %v446
        %v452 = vadd.s32 %v451, 127
        %v453 = vshll.u32 %v452, 23
        %v454 = vor.u32 4788187, %v453
        %v455 = vand.u32 2147483647, %v454
        %v457 = vcvt.s32.f32 %v450
        %v458 = vmul.f32 %v457, %v455
        %v459 = vxor.u32 %v458, 2147483648
        %v460 = vsel %vm377, %v459, %v458
        %v461 = vsub.s32 4, %v437
        %v462 = vsel %vm377, %v461, %v437
        %v463 = vsel %vm376, %v374, %v460
        %v464 = vsel %vm376, 0, %v462
        %v465 = vcosq.f32.pop %v463
        %v466 = vsinq.f32.pop %v463
        %vm467 = vweird.f32 %v374
        %v468 = vand.u32 %v464, 3
        %vm469 = vcmp.lt.s32.totalorder %v468, 2
        %vm470 = vcmp.eq.s32.totalorder %v468, 0
        %v471 = vxor.u32 %v466, 2147483648
        %v472 = vsel %vm470, %v465, %v471
        %vm473 = vcmp.eq.s32.totalorder %v468, 2
        %v474 = vxor.u32 %v465, 2147483648
        %v475 = vsel %vm473, %v474, %v466
        %v476 = vsel %vm469, %v472, %v475
        %v477 = vsel %vm467, nan, %v476
        %v478 = vadd.f32 %v356, %v477
        %s479 = sld [smem:[#allocation2 + $0x8]]
        %v480 = vstv %s479
        %v481 = vmul.f32 %v480, %v229
        %s482 = sld [smem:[#allocation2 + $0x9]]
        %v483 = vstv %s482
        %v484 = vmul.f32 %v483, %v231
        %v485 = vadd.f32 %v481, %v484
        %s486 = sld [smem:[#allocation2 + $0xa]]
        %v487 = vstv %s486
        %v488 = vmul.f32 %v487, %v233
        %v489 = vadd.f32 %v485, %v488
        %s490 = sld [smem:[#allocation2 + $0xb]]
        %v491 = vstv %s490
        %v492 = vmul.f32 %v491, %v235
        %v493 = vadd.f32 %v489, %v492
        %s494 = sld [smem:[#allocation4 + $0x2]]
        %v495 = vstv %s494
        %v496 = vadd.f32 %v493, %v495
        %v497 = vand.u32 2147483647, %v496
        %vm498 = vcmp.le.f32.partialorder %v497, 0.7853982
        %vm499 = vcmp.lt.s32.totalorder %v496, 0
        %v500 = vand.u32 %v496, 2139095040
        %v501 = vshrl.u32 %v500, 23
        %v502 = vsub.s32 %v501, 127
        %v503 = vand.u32 2147483647, %v496
        %v504 = vand.u32 %v503, 8388607
        %v505 = vor.u32 %v504, 8388608
        %v506 = vsub.s32 0, %v505
        %v507 = vadd.s32 %v502, 1
        %vm508 = vcmp.gt.s32.totalorder %v507, 0
        %v509 = vsel %vm508, %v507, 0
        %v510 = vshrl.u32 %v509, 5
        %v511 = vand.u32 %v509, 31
        %v512 = vsub.s32 32, %v511
        %v513 = vshrl.u32 683565275, %v512
        %v514 = vshll.u32 683565275, %v511
        %v515 = vshrl.u32 2475754826, %v512
        %v516 = vor.u32 %v514, %v515
        %v517 = vshll.u32 2475754826, %v511
        %v518 = vshrl.u32 2131351028, %v512
        %v519 = vor.u32 %v517, %v518
        %v520 = vshll.u32 2131351028, %v511
        %v521 = vshrl.u32 2102212464, %v512
        %v522 = vor.u32 %v520, %v521
        %v523 = vshll.u32 2102212464, %v511
        %v524 = vshrl.u32 920167782, %v512
        %v525 = vor.u32 %v523, %v524
        %v526 = vshll.u32 920167782, %v511
        %v527 = vshrl.u32 1326507024, %v512
        %v528 = vor.u32 %v526, %v527
        %vm529 = vcmp.lt.s32.totalorder %v510, 1
        %vm530 = vcmp.lt.s32.totalorder %v510, 2
        %vm531 = vcmp.lt.s32.totalorder %v510, 3
        %vm532 = vcmp.lt.s32.totalorder %v510, 4
        %v533 = vsel %vm529, %v513, %v516
        %v534 = vsel %vm532, %v522, 2102212464
        %v535 = vsel %vm531, %v519, %v534
        %v536 = vsel %vm530, %v533, %v535
        %v537 = vsel %vm529, %v516, %v519
        %v538 = vsel %vm532, %v525, 920167782
        %v539 = vsel %vm531, %v522, %v538
        %v540 = vsel %vm530, %v537, %v539
        %v541 = vsel %vm529, %v519, %v522
        %v542 = vsel %vm532, %v528, 1326507024
        %v543 = vsel %vm531, %v525, %v542
        %v544 = vsel %vm530, %v541, %v543
        %v545 = vshll.u32 %v505, 8
        %v546 = vmul.u32.u64.compose %v545, %v544
        %v547 = vextract.low.u32 %v546
        %v548 = vextract.high.u32 %v546
        %v549 = vmul.u32.u64.compose %v545, %v540
        %v550 = vextract.low.u32 %v549
        %v551 = vextract.high.u32 %v549
        %v552 = vmul.u32 %v545, %v536
        %v553 = vadd.s32 %v548, %v550
        %vm554 = vc.u32 %v548, %v550
        %v555 = vadd.s32 %v551, 1
        %v556 = vsel %vm554, %v555, %v551
        %v557 = vadd.s32 %v552, %v556
        %v558 = vadd.s32 %v557, 536870912
        %v559 = vshrl.u32 %v558, 30
        %v560 = vshll.u32 %v559, 30
        %v561 = vsub.s32 %v557, %v560
        %vm562 = vcmp.lt.s32.totalorder %v561, 0
        %v563 = vsub.s32 0, %v561
        %v564 = vsel %vm562, %v563, %v561
        %v565 = vclz %v564
        %v566 = vsub.s32 %v565, 2
        %vm567 = vcmp.gt.s32.totalorder 0, %v566
        %v568 = vsel %vm567, 0, %v566
        %v569 = vsub.s32 32, %v568
        %v570 = vshll.u32 %v561, %v568
        %v571 = vshrl.u32 %v553, %v569
        %v572 = vor.u32 %v570, %v571
        %v573 = vsub.s32 4294967266, %v568
        %v574 = vadd.s32 %v573, 127
        %v575 = vshll.u32 %v574, 23
        %v576 = vor.u32 4788187, %v575
        %v577 = vand.u32 2147483647, %v576
        %v579 = vcvt.s32.f32 %v572
        %v580 = vmul.f32 %v579, %v577
        %v581 = vxor.u32 %v580, 2147483648
        %v582 = vsel %vm499, %v581, %v580
        %v583 = vsub.s32 4, %v559
        %v584 = vsel %vm499, %v583, %v559
        %v585 = vsel %vm498, %v496, %v582
        %v586 = vsel %vm498, 0, %v584
        %v587 = vcosq.f32.pop %v585
        %v588 = vsinq.f32.pop %v585
        %vm589 = vweird.f32 %v496
        %v590 = vand.u32 %v586, 3
        %vm591 = vcmp.lt.s32.totalorder %v590, 2
        %vm592 = vcmp.eq.s32.totalorder %v590, 0
        %v593 = vxor.u32 %v588, 2147483648
        %v594 = vsel %vm592, %v587, %v593
        %vm595 = vcmp.eq.s32.totalorder %v590, 2
        %v596 = vxor.u32 %v587, 2147483648
        %v597 = vsel %vm595, %v596, %v588
        %v598 = vsel %vm591, %v594, %v597
        %v599 = vsel %vm589, nan, %v598
        %v600 = vadd.f32 %v478, %v599
        %s601 = sld [smem:[#allocation2 + $0xc]]
        %v602 = vstv %s601
        %v603 = vmul.f32 %v602, %v229
        %s604 = sld [smem:[#allocation2 + $0xd]]
        %v605 = vstv %s604
        %v606 = vmul.f32 %v605, %v231
        %v607 = vadd.f32 %v603, %v606
        %s608 = sld [smem:[#allocation2 + $0xe]]
        %v609 = vstv %s608
        %v610 = vmul.f32 %v609, %v233
        %v611 = vadd.f32 %v607, %v610
        %s612 = sld [smem:[#allocation2 + $0xf]]
        %v613 = vstv %s612
        %v614 = vmul.f32 %v613, %v235
        %v615 = vadd.f32 %v611, %v614
        %s616 = sld [smem:[#allocation4 + $0x3]]
        %v617 = vstv %s616
        %v618 = vadd.f32 %v615, %v617
        %v619 = vand.u32 2147483647, %v618
        %vm620 = vcmp.le.f32.partialorder %v619, 0.7853982
        %vm621 = vcmp.lt.s32.totalorder %v618, 0
        %v622 = vand.u32 %v618, 2139095040
        %v623 = vshrl.u32 %v622, 23
        %v624 = vsub.s32 %v623, 127
        %v625 = vand.u32 2147483647, %v618
        %v626 = vand.u32 %v625, 8388607
        %v627 = vor.u32 %v626, 8388608
        %v628 = vsub.s32 0, %v627
        %v629 = vadd.s32 %v624, 1
        %vm630 = vcmp.gt.s32.totalorder %v629, 0
        %v631 = vsel %vm630, %v629, 0
        %v632 = vshrl.u32 %v631, 5
        %v633 = vand.u32 %v631, 31
        %v634 = vsub.s32 32, %v633
        %v635 = vshrl.u32 683565275, %v634
        %v636 = vshll.u32 683565275, %v633
        %v637 = vshrl.u32 2475754826, %v634
        %v638 = vor.u32 %v636, %v637
        %v639 = vshll.u32 2475754826, %v633
        %v640 = vshrl.u32 2131351028, %v634
        %v641 = vor.u32 %v639, %v640
        %v642 = vshll.u32 2131351028, %v633
        %v643 = vshrl.u32 2102212464, %v634
        %v644 = vor.u32 %v642, %v643
        %v645 = vshll.u32 2102212464, %v633
        %v646 = vshrl.u32 920167782, %v634
        %v647 = vor.u32 %v645, %v646
        %v648 = vshll.u32 920167782, %v633
        %v649 = vshrl.u32 1326507024, %v634
        %v650 = vor.u32 %v648, %v649
        %vm651 = vcmp.lt.s32.totalorder %v632, 1
        %vm652 = vcmp.lt.s32.totalorder %v632, 2
        %vm653 = vcmp.lt.s32.totalorder %v632, 3
        %vm654 = vcmp.lt.s32.totalorder %v632, 4
        %v655 = vsel %vm651, %v635, %v638
        %v656 = vsel %vm654, %v644, 2102212464
        %v657 = vsel %vm653, %v641, %v656
        %v658 = vsel %vm652, %v655, %v657
        %v659 = vsel %vm651, %v638, %v641
        %v660 = vsel %vm654, %v647, 920167782
        %v661 = vsel %vm653, %v644, %v660
        %v662 = vsel %vm652, %v659, %v661
        %v663 = vsel %vm651, %v641, %v644
        %v664 = vsel %vm654, %v650, 1326507024
        %v665 = vsel %vm653, %v647, %v664
        %v666 = vsel %vm652, %v663, %v665
        %v667 = vshll.u32 %v627, 8
        %v668 = vmul.u32.u64.compose %v667, %v666
        %v669 = vextract.low.u32 %v668
        %v670 = vextract.high.u32 %v668
        %v671 = vmul.u32.u64.compose %v667, %v662
        %v672 = vextract.low.u32 %v671
        %v673 = vextract.high.u32 %v671
        %v674 = vmul.u32 %v667, %v658
        %v675 = vadd.s32 %v670, %v672
        %vm676 = vc.u32 %v670, %v672
        %v677 = vadd.s32 %v673, 1
        %v678 = vsel %vm676, %v677, %v673
        %v679 = vadd.s32 %v674, %v678
        %v680 = vadd.s32 %v679, 536870912
        %v681 = vshrl.u32 %v680, 30
        %v682 = vshll.u32 %v681, 30
        %v683 = vsub.s32 %v679, %v682
        %vm684 = vcmp.lt.s32.totalorder %v683, 0
        %v685 = vsub.s32 0, %v683
        %v686 = vsel %vm684, %v685, %v683
        %v687 = vclz %v686
        %v688 = vsub.s32 %v687, 2
        %vm689 = vcmp.gt.s32.totalorder 0, %v688
        %v690 = vsel %vm689, 0, %v688
        %v691 = vsub.s32 32, %v690
        %v692 = vshll.u32 %v683, %v690
        %v693 = vshrl.u32 %v675, %v691
        %v694 = vor.u32 %v692, %v693
        %v695 = vsub.s32 4294967266, %v690
        %v696 = vadd.s32 %v695, 127
        %v697 = vshll.u32 %v696, 23
        %v698 = vor.u32 4788187, %v697
        %v699 = vand.u32 2147483647, %v698
        %v701 = vcvt.s32.f32 %v694
        %v702 = vmul.f32 %v701, %v699
        %v703 = vxor.u32 %v702, 2147483648
        %v704 = vsel %vm621, %v703, %v702
        %v705 = vsub.s32 4, %v681
        %v706 = vsel %vm621, %v705, %v681
        %v707 = vsel %vm620, %v618, %v704
        %v708 = vsel %vm620, 0, %v706
        %v709 = vcosq.f32.pop %v707
        %v710 = vsinq.f32.pop %v707
        %vm711 = vweird.f32 %v618
        %v712 = vand.u32 %v708, 3
        %vm713 = vcmp.lt.s32.totalorder %v712, 2
        %vm714 = vcmp.eq.s32.totalorder %v712, 0
        %v715 = vxor.u32 %v710, 2147483648
        %v716 = vsel %vm714, %v709, %v715
        %vm717 = vcmp.eq.s32.totalorder %v712, 2
        %v718 = vxor.u32 %v709, 2147483648
        %v719 = vsel %vm717, %v718, %v710
        %v720 = vsel %vm713, %v716, %v719
        %v721 = vsel %vm711, nan, %v720
        %v722 = vadd.f32 %v600, %v721
        %v723 = vmul.f32 %v722, 0.25
        %724 = vst [vmem:[%s228] sm:$0xff] %v723
        %s725 = scalar_lea.vmem %s220, 32
        %v726 = vld [vmem:[%s725] sm:$0xff]
        %s727 = scalar_lea.vmem %s220, 40
        %v728 = vld [vmem:[%s727] sm:$0xff]
        %s729 = scalar_lea.vmem %s220, 48
        %v730 = vld [vmem:[%s729] sm:$0xff]
        %s731 = scalar_lea.vmem %s220, 56
        %v732 = vld [vmem:[%s731] sm:$0xff]
        %s733 = sld [smem:[#allocation2 + $0x10]]
        %v734 = vstv %s733
        %v735 = vmul.f32 %v734, %v726
        %s736 = sld [smem:[#allocation2 + $0x11]]
        %v737 = vstv %s736
        %v738 = vmul.f32 %v737, %v728
        %v739 = vadd.f32 %v735, %v738
        %s740 = sld [smem:[#allocation2 + $0x12]]
        %v741 = vstv %s740
        %v742 = vmul.f32 %v741, %v730
        %v743 = vadd.f32 %v739, %v742
        %s744 = sld [smem:[#allocation2 + $0x13]]
        %v745 = vstv %s744
        %v746 = vmul.f32 %v745, %v732
        %v747 = vadd.f32 %v743, %v746
        %s748 = sld [smem:[#allocation4 + $0x4]]
        %v749 = vstv %s748
        %v750 = vadd.f32 %v747, %v749
        %v751 = vand.u32 2147483647, %v750
        %vm752 = vcmp.le.f32.partialorder %v751, 0.7853982
        %vm753 = vcmp.lt.s32.totalorder %v750, 0
        %v754 = vand.u32 %v750, 2139095040
        %v755 = vshrl.u32 %v754, 23
        %v756 = vsub.s32 %v755, 127
        %v757 = vand.u32 2147483647, %v750
        %v758 = vand.u32 %v757, 8388607
        %v759 = vor.u32 %v758, 8388608
        %v760 = vsub.s32 0, %v759
        %v761 = vadd.s32 %v756, 1
        %vm762 = vcmp.gt.s32.totalorder %v761, 0
        %v763 = vsel %vm762, %v761, 0
        %v764 = vshrl.u32 %v763, 5
        %v765 = vand.u32 %v763, 31
        %v766 = vsub.s32 32, %v765
        %v767 = vshrl.u32 683565275, %v766
        %v768 = vshll.u32 683565275, %v765
        %v769 = vshrl.u32 2475754826, %v766
        %v770 = vor.u32 %v768, %v769
        %v771 = vshll.u32 2475754826, %v765
        %v772 = vshrl.u32 2131351028, %v766
        %v773 = vor.u32 %v771, %v772
        %v774 = vshll.u32 2131351028, %v765
        %v775 = vshrl.u32 2102212464, %v766
        %v776 = vor.u32 %v774, %v775
        %v777 = vshll.u32 2102212464, %v765
        %v778 = vshrl.u32 920167782, %v766
        %v779 = vor.u32 %v777, %v778
        %v780 = vshll.u32 920167782, %v765
        %v781 = vshrl.u32 1326507024, %v766
        %v782 = vor.u32 %v780, %v781
        %vm783 = vcmp.lt.s32.totalorder %v764, 1
        %vm784 = vcmp.lt.s32.totalorder %v764, 2
        %vm785 = vcmp.lt.s32.totalorder %v764, 3
        %vm786 = vcmp.lt.s32.totalorder %v764, 4
        %v787 = vsel %vm783, %v767, %v770
        %v788 = vsel %vm786, %v776, 2102212464
        %v789 = vsel %vm785, %v773, %v788
        %v790 = vsel %vm784, %v787, %v789
        %v791 = vsel %vm783, %v770, %v773
        %v792 = vsel %vm786, %v779, 920167782
        %v793 = vsel %vm785, %v776, %v792
        %v794 = vsel %vm784, %v791, %v793
        %v795 = vsel %vm783, %v773, %v776
        %v796 = vsel %vm786, %v782, 1326507024
        %v797 = vsel %vm785, %v779, %v796
        %v798 = vsel %vm784, %v795, %v797
        %v799 = vshll.u32 %v759, 8
        %v800 = vmul.u32.u64.compose %v799, %v798
        %v801 = vextract.low.u32 %v800
        %v802 = vextract.high.u32 %v800
        %v803 = vmul.u32.u64.compose %v799, %v794
        %v804 = vextract.low.u32 %v803
        %v805 = vextract.high.u32 %v803
        %v806 = vmul.u32 %v799, %v790
        %v807 = vadd.s32 %v802, %v804
        %vm808 = vc.u32 %v802, %v804
        %v809 = vadd.s32 %v805, 1
        %v810 = vsel %vm808, %v809, %v805
        %v811 = vadd.s32 %v806, %v810
        %v812 = vadd.s32 %v811, 536870912
        %v813 = vshrl.u32 %v812, 30
        %v814 = vshll.u32 %v813, 30
        %v815 = vsub.s32 %v811, %v814
        %vm816 = vcmp.lt.s32.totalorder %v815, 0
        %v817 = vsub.s32 0, %v815
        %v818 = vsel %vm816, %v817, %v815
        %v819 = vclz %v818
        %v820 = vsub.s32 %v819, 2
        %vm821 = vcmp.gt.s32.totalorder 0, %v820
        %v822 = vsel %vm821, 0, %v820
        %v823 = vsub.s32 32, %v822
        %v824 = vshll.u32 %v815, %v822
        %v825 = vshrl.u32 %v807, %v823
        %v826 = vor.u32 %v824, %v825
        %v827 = vsub.s32 4294967266, %v822
        %v828 = vadd.s32 %v827, 127
        %v829 = vshll.u32 %v828, 23
        %v830 = vor.u32 4788187, %v829
        %v831 = vand.u32 2147483647, %v830
        %v833 = vcvt.s32.f32 %v826
        %v834 = vmul.f32 %v833, %v831
        %v835 = vxor.u32 %v834, 2147483648
        %v836 = vsel %vm753, %v835, %v834
        %v837 = vsub.s32 4, %v813
        %v838 = vsel %vm753, %v837, %v813
        %v839 = vsel %vm752, %v750, %v836
        %v840 = vsel %vm752, 0, %v838
        %v841 = vcosq.f32.pop %v839
        %v842 = vsinq.f32.pop %v839
        %vm843 = vweird.f32 %v750
        %v844 = vand.u32 %v840, 3
        %vm845 = vcmp.lt.s32.totalorder %v844, 2
        %vm846 = vcmp.eq.s32.totalorder %v844, 0
        %v847 = vxor.u32 %v842, 2147483648
        %v848 = vsel %vm846, %v841, %v847
        %vm849 = vcmp.eq.s32.totalorder %v844, 2
        %v850 = vxor.u32 %v841, 2147483648
        %v851 = vsel %vm849, %v850, %v842
        %v852 = vsel %vm845, %v848, %v851
        %v853 = vsel %vm843, nan, %v852
        %s854 = sld [smem:[#allocation2 + $0x14]]
        %v855 = vstv %s854
        %v856 = vmul.f32 %v855, %v726
        %s857 = sld [smem:[#allocation2 + $0x15]]
        %v858 = vstv %s857
        %v859 = vmul.f32 %v858, %v728
        %v860 = vadd.f32 %v856, %v859
        %s861 = sld [smem:[#allocation2 + $0x16]]
        %v862 = vstv %s861
        %v863 = vmul.f32 %v862, %v730
        %v864 = vadd.f32 %v860, %v863
        %s865 = sld [smem:[#allocation2 + $0x17]]
        %v866 = vstv %s865
        %v867 = vmul.f32 %v866, %v732
        %v868 = vadd.f32 %v864, %v867
        %s869 = sld [smem:[#allocation4 + $0x5]]
        %v870 = vstv %s869
        %v871 = vadd.f32 %v868, %v870
        %v872 = vand.u32 2147483647, %v871
        %vm873 = vcmp.le.f32.partialorder %v872, 0.7853982
        %vm874 = vcmp.lt.s32.totalorder %v871, 0
        %v875 = vand.u32 %v871, 2139095040
        %v876 = vshrl.u32 %v875, 23
        %v877 = vsub.s32 %v876, 127
        %v878 = vand.u32 2147483647, %v871
        %v879 = vand.u32 %v878, 8388607
        %v880 = vor.u32 %v879, 8388608
        %v881 = vsub.s32 0, %v880
        %v882 = vadd.s32 %v877, 1
        %vm883 = vcmp.gt.s32.totalorder %v882, 0
        %v884 = vsel %vm883, %v882, 0
        %v885 = vshrl.u32 %v884, 5
        %v886 = vand.u32 %v884, 31
        %v887 = vsub.s32 32, %v886
        %v888 = vshrl.u32 683565275, %v887
        %v889 = vshll.u32 683565275, %v886
        %v890 = vshrl.u32 2475754826, %v887
        %v891 = vor.u32 %v889, %v890
        %v892 = vshll.u32 2475754826, %v886
        %v893 = vshrl.u32 2131351028, %v887
        %v894 = vor.u32 %v892, %v893
        %v895 = vshll.u32 2131351028, %v886
        %v896 = vshrl.u32 2102212464, %v887
        %v897 = vor.u32 %v895, %v896
        %v898 = vshll.u32 2102212464, %v886
        %v899 = vshrl.u32 920167782, %v887
        %v900 = vor.u32 %v898, %v899
        %v901 = vshll.u32 920167782, %v886
        %v902 = vshrl.u32 1326507024, %v887
        %v903 = vor.u32 %v901, %v902
        %vm904 = vcmp.lt.s32.totalorder %v885, 1
        %vm905 = vcmp.lt.s32.totalorder %v885, 2
        %vm906 = vcmp.lt.s32.totalorder %v885, 3
        %vm907 = vcmp.lt.s32.totalorder %v885, 4
        %v908 = vsel %vm904, %v888, %v891
        %v909 = vsel %vm907, %v897, 2102212464
        %v910 = vsel %vm906, %v894, %v909
        %v911 = vsel %vm905, %v908, %v910
        %v912 = vsel %vm904, %v891, %v894
        %v913 = vsel %vm907, %v900, 920167782
        %v914 = vsel %vm906, %v897, %v913
        %v915 = vsel %vm905, %v912, %v914
        %v916 = vsel %vm904, %v894, %v897
        %v917 = vsel %vm907, %v903, 1326507024
        %v918 = vsel %vm906, %v900, %v917
        %v919 = vsel %vm905, %v916, %v918
        %v920 = vshll.u32 %v880, 8
        %v921 = vmul.u32.u64.compose %v920, %v919
        %v922 = vextract.low.u32 %v921
        %v923 = vextract.high.u32 %v921
        %v924 = vmul.u32.u64.compose %v920, %v915
        %v925 = vextract.low.u32 %v924
        %v926 = vextract.high.u32 %v924
        %v927 = vmul.u32 %v920, %v911
        %v928 = vadd.s32 %v923, %v925
        %vm929 = vc.u32 %v923, %v925
        %v930 = vadd.s32 %v926, 1
        %v931 = vsel %vm929, %v930, %v926
        %v932 = vadd.s32 %v927, %v931
        %v933 = vadd.s32 %v932, 536870912
        %v934 = vshrl.u32 %v933, 30
        %v935 = vshll.u32 %v934, 30
        %v936 = vsub.s32 %v932, %v935
        %vm937 = vcmp.lt.s32.totalorder %v936, 0
        %v938 = vsub.s32 0, %v936
        %v939 = vsel %vm937, %v938, %v936
        %v940 = vclz %v939
        %v941 = vsub.s32 %v940, 2
        %vm942 = vcmp.gt.s32.totalorder 0, %v941
        %v943 = vsel %vm942, 0, %v941
        %v944 = vsub.s32 32, %v943
        %v945 = vshll.u32 %v936, %v943
        %v946 = vshrl.u32 %v928, %v944
        %v947 = vor.u32 %v945, %v946
        %v948 = vsub.s32 4294967266, %v943
        %v949 = vadd.s32 %v948, 127
        %v950 = vshll.u32 %v949, 23
        %v951 = vor.u32 4788187, %v950
        %v952 = vand.u32 2147483647, %v951
        %v954 = vcvt.s32.f32 %v947
        %v955 = vmul.f32 %v954, %v952
        %v956 = vxor.u32 %v955, 2147483648
        %v957 = vsel %vm874, %v956, %v955
        %v958 = vsub.s32 4, %v934
        %v959 = vsel %vm874, %v958, %v934
        %v960 = vsel %vm873, %v871, %v957
        %v961 = vsel %vm873, 0, %v959
        %v962 = vcosq.f32.pop %v960
        %v963 = vsinq.f32.pop %v960
        %vm964 = vweird.f32 %v871
        %v965 = vand.u32 %v961, 3
        %vm966 = vcmp.lt.s32.totalorder %v965, 2
        %vm967 = vcmp.eq.s32.totalorder %v965, 0
        %v968 = vxor.u32 %v963, 2147483648
        %v969 = vsel %vm967, %v962, %v968
        %vm970 = vcmp.eq.s32.totalorder %v965, 2
        %v971 = vxor.u32 %v962, 2147483648
        %v972 = vsel %vm970, %v971, %v963
        %v973 = vsel %vm966, %v969, %v972
        %v974 = vsel %vm964, nan, %v973
        %v975 = vadd.f32 %v853, %v974
        %s976 = sld [smem:[#allocation2 + $0x18]]
        %v977 = vstv %s976
        %v978 = vmul.f32 %v977, %v726
        %s979 = sld [smem:[#allocation2 + $0x19]]
        %v980 = vstv %s979
        %v981 = vmul.f32 %v980, %v728
        %v982 = vadd.f32 %v978, %v981
        %s983 = sld [smem:[#allocation2 + $0x1a]]
        %v984 = vstv %s983
        %v985 = vmul.f32 %v984, %v730
        %v986 = vadd.f32 %v982, %v985
        %s987 = sld [smem:[#allocation2 + $0x1b]]
        %v988 = vstv %s987
        %v989 = vmul.f32 %v988, %v732
        %v990 = vadd.f32 %v986, %v989
        %s991 = sld [smem:[#allocation4 + $0x6]]
        %v992 = vstv %s991
        %v993 = vadd.f32 %v990, %v992
        %v994 = vand.u32 2147483647, %v993
        %vm995 = vcmp.le.f32.partialorder %v994, 0.7853982
        %vm996 = vcmp.lt.s32.totalorder %v993, 0
        %v997 = vand.u32 %v993, 2139095040
        %v998 = vshrl.u32 %v997, 23
        %v999 = vsub.s32 %v998, 127
        %v1000 = vand.u32 2147483647, %v993
        %v1001 = vand.u32 %v1000, 8388607
        %v1002 = vor.u32 %v1001, 8388608
        %v1003 = vsub.s32 0, %v1002
        %v1004 = vadd.s32 %v999, 1
        %vm1005 = vcmp.gt.s32.totalorder %v1004, 0
        %v1006 = vsel %vm1005, %v1004, 0
        %v1007 = vshrl.u32 %v1006, 5
        %v1008 = vand.u32 %v1006, 31
        %v1009 = vsub.s32 32, %v1008
        %v1010 = vshrl.u32 683565275, %v1009
        %v1011 = vshll.u32 683565275, %v1008
        %v1012 = vshrl.u32 2475754826, %v1009
        %v1013 = vor.u32 %v1011, %v1012
        %v1014 = vshll.u32 2475754826, %v1008
        %v1015 = vshrl.u32 2131351028, %v1009
        %v1016 = vor.u32 %v1014, %v1015
        %v1017 = vshll.u32 2131351028, %v1008
        %v1018 = vshrl.u32 2102212464, %v1009
        %v1019 = vor.u32 %v1017, %v1018
        %v1020 = vshll.u32 2102212464, %v1008
        %v1021 = vshrl.u32 920167782, %v1009
        %v1022 = vor.u32 %v1020, %v1021
        %v1023 = vshll.u32 920167782, %v1008
        %v1024 = vshrl.u32 1326507024, %v1009
        %v1025 = vor.u32 %v1023, %v1024
        %vm1026 = vcmp.lt.s32.totalorder %v1007, 1
        %vm1027 = vcmp.lt.s32.totalorder %v1007, 2
        %vm1028 = vcmp.lt.s32.totalorder %v1007, 3
        %vm1029 = vcmp.lt.s32.totalorder %v1007, 4
        %v1030 = vsel %vm1026, %v1010, %v1013
        %v1031 = vsel %vm1029, %v1019, 2102212464
        %v1032 = vsel %vm1028, %v1016, %v1031
        %v1033 = vsel %vm1027, %v1030, %v1032
        %v1034 = vsel %vm1026, %v1013, %v1016
        %v1035 = vsel %vm1029, %v1022, 920167782
        %v1036 = vsel %vm1028, %v1019, %v1035
        %v1037 = vsel %vm1027, %v1034, %v1036
        %v1038 = vsel %vm1026, %v1016, %v1019
        %v1039 = vsel %vm1029, %v1025, 1326507024
        %v1040 = vsel %vm1028, %v1022, %v1039
        %v1041 = vsel %vm1027, %v1038, %v1040
        %v1042 = vshll.u32 %v1002, 8
        %v1043 = vmul.u32.u64.compose %v1042, %v1041
        %v1044 = vextract.low.u32 %v1043
        %v1045 = vextract.high.u32 %v1043
        %v1046 = vmul.u32.u64.compose %v1042, %v1037
        %v1047 = vextract.low.u32 %v1046
        %v1048 = vextract.high.u32 %v1046
        %v1049 = vmul.u32 %v1042, %v1033
        %v1050 = vadd.s32 %v1045, %v1047
        %vm1051 = vc.u32 %v1045, %v1047
        %v1052 = vadd.s32 %v1048, 1
        %v1053 = vsel %vm1051, %v1052, %v1048
        %v1054 = vadd.s32 %v1049, %v1053
        %v1055 = vadd.s32 %v1054, 536870912
        %v1056 = vshrl.u32 %v1055, 30
        %v1057 = vshll.u32 %v1056, 30
        %v1058 = vsub.s32 %v1054, %v1057
        %vm1059 = vcmp.lt.s32.totalorder %v1058, 0
        %v1060 = vsub.s32 0, %v1058
        %v1061 = vsel %vm1059, %v1060, %v1058
        %v1062 = vclz %v1061
        %v1063 = vsub.s32 %v1062, 2
        %vm1064 = vcmp.gt.s32.totalorder 0, %v1063
        %v1065 = vsel %vm1064, 0, %v1063
        %v1066 = vsub.s32 32, %v1065
        %v1067 = vshll.u32 %v1058, %v1065
        %v1068 = vshrl.u32 %v1050, %v1066
        %v1069 = vor.u32 %v1067, %v1068
        %v1070 = vsub.s32 4294967266, %v1065
        %v1071 = vadd.s32 %v1070, 127
        %v1072 = vshll.u32 %v1071, 23
        %v1073 = vor.u32 4788187, %v1072
        %v1074 = vand.u32 2147483647, %v1073
        %v1076 = vcvt.s32.f32 %v1069
        %v1077 = vmul.f32 %v1076, %v1074
        %v1078 = vxor.u32 %v1077, 2147483648
        %v1079 = vsel %vm996, %v1078, %v1077
        %v1080 = vsub.s32 4, %v1056
        %v1081 = vsel %vm996, %v1080, %v1056
        %v1082 = vsel %vm995, %v993, %v1079
        %v1083 = vsel %vm995, 0, %v1081
        %v1084 = vcosq.f32.pop %v1082
        %v1085 = vsinq.f32.pop %v1082
        %vm1086 = vweird.f32 %v993
        %v1087 = vand.u32 %v1083, 3
        %vm1088 = vcmp.lt.s32.totalorder %v1087, 2
        %vm1089 = vcmp.eq.s32.totalorder %v1087, 0
        %v1090 = vxor.u32 %v1085, 2147483648
        %v1091 = vsel %vm1089, %v1084, %v1090
        %vm1092 = vcmp.eq.s32.totalorder %v1087, 2
        %v1093 = vxor.u32 %v1084, 2147483648
        %v1094 = vsel %vm1092, %v1093, %v1085
        %v1095 = vsel %vm1088, %v1091, %v1094
        %v1096 = vsel %vm1086, nan, %v1095
        %v1097 = vadd.f32 %v975, %v1096
        %s1098 = sld [smem:[#allocation2 + $0x1c]]
        %v1099 = vstv %s1098
        %v1100 = vmul.f32 %v1099, %v726
        %s1101 = sld [smem:[#allocation2 + $0x1d]]
        %v1102 = vstv %s1101
        %v1103 = vmul.f32 %v1102, %v728
        %v1104 = vadd.f32 %v1100, %v1103
        %s1105 = sld [smem:[#allocation2 + $0x1e]]
        %v1106 = vstv %s1105
        %v1107 = vmul.f32 %v1106, %v730
        %v1108 = vadd.f32 %v1104, %v1107
        %s1109 = sld [smem:[#allocation2 + $0x1f]]
        %v1110 = vstv %s1109
        %v1111 = vmul.f32 %v1110, %v732
        %v1112 = vadd.f32 %v1108, %v1111
        %s1113 = sld [smem:[#allocation4 + $0x7]]
        %v1114 = vstv %s1113
        %v1115 = vadd.f32 %v1112, %v1114
        %v1116 = vand.u32 2147483647, %v1115
        %vm1117 = vcmp.le.f32.partialorder %v1116, 0.7853982
        %vm1118 = vcmp.lt.s32.totalorder %v1115, 0
        %v1119 = vand.u32 %v1115, 2139095040
        %v1120 = vshrl.u32 %v1119, 23
        %v1121 = vsub.s32 %v1120, 127
        %v1122 = vand.u32 2147483647, %v1115
        %v1123 = vand.u32 %v1122, 8388607
        %v1124 = vor.u32 %v1123, 8388608
        %v1125 = vsub.s32 0, %v1124
        %v1126 = vadd.s32 %v1121, 1
        %vm1127 = vcmp.gt.s32.totalorder %v1126, 0
        %v1128 = vsel %vm1127, %v1126, 0
        %v1129 = vshrl.u32 %v1128, 5
        %v1130 = vand.u32 %v1128, 31
        %v1131 = vsub.s32 32, %v1130
        %v1132 = vshrl.u32 683565275, %v1131
        %v1133 = vshll.u32 683565275, %v1130
        %v1134 = vshrl.u32 2475754826, %v1131
        %v1135 = vor.u32 %v1133, %v1134
        %v1136 = vshll.u32 2475754826, %v1130
        %v1137 = vshrl.u32 2131351028, %v1131
        %v1138 = vor.u32 %v1136, %v1137
        %v1139 = vshll.u32 2131351028, %v1130
        %v1140 = vshrl.u32 2102212464, %v1131
        %v1141 = vor.u32 %v1139, %v1140
        %v1142 = vshll.u32 2102212464, %v1130
        %v1143 = vshrl.u32 920167782, %v1131
        %v1144 = vor.u32 %v1142, %v1143
        %v1145 = vshll.u32 920167782, %v1130
        %v1146 = vshrl.u32 1326507024, %v1131
        %v1147 = vor.u32 %v1145, %v1146
        %vm1148 = vcmp.lt.s32.totalorder %v1129, 1
        %vm1149 = vcmp.lt.s32.totalorder %v1129, 2
        %vm1150 = vcmp.lt.s32.totalorder %v1129, 3
        %vm1151 = vcmp.lt.s32.totalorder %v1129, 4
        %v1152 = vsel %vm1148, %v1132, %v1135
        %v1153 = vsel %vm1151, %v1141, 2102212464
        %v1154 = vsel %vm1150, %v1138, %v1153
        %v1155 = vsel %vm1149, %v1152, %v1154
        %v1156 = vsel %vm1148, %v1135, %v1138
        %v1157 = vsel %vm1151, %v1144, 920167782
        %v1158 = vsel %vm1150, %v1141, %v1157
        %v1159 = vsel %vm1149, %v1156, %v1158
        %v1160 = vsel %vm1148, %v1138, %v1141
        %v1161 = vsel %vm1151, %v1147, 1326507024
        %v1162 = vsel %vm1150, %v1144, %v1161
        %v1163 = vsel %vm1149, %v1160, %v1162
        %v1164 = vshll.u32 %v1124, 8
        %v1165 = vmul.u32.u64.compose %v1164, %v1163
        %v1166 = vextract.low.u32 %v1165
        %v1167 = vextract.high.u32 %v1165
        %v1168 = vmul.u32.u64.compose %v1164, %v1159
        %v1169 = vextract.low.u32 %v1168
        %v1170 = vextract.high.u32 %v1168
        %v1171 = vmul.u32 %v1164, %v1155
        %v1172 = vadd.s32 %v1167, %v1169
        %vm1173 = vc.u32 %v1167, %v1169
        %v1174 = vadd.s32 %v1170, 1
        %v1175 = vsel %vm1173, %v1174, %v1170
        %v1176 = vadd.s32 %v1171, %v1175
        %v1177 = vadd.s32 %v1176, 536870912
        %v1178 = vshrl.u32 %v1177, 30
        %v1179 = vshll.u32 %v1178, 30
        %v1180 = vsub.s32 %v1176, %v1179
        %vm1181 = vcmp.lt.s32.totalorder %v1180, 0
        %v1182 = vsub.s32 0, %v1180
        %v1183 = vsel %vm1181, %v1182, %v1180
        %v1184 = vclz %v1183
        %v1185 = vsub.s32 %v1184, 2
        %vm1186 = vcmp.gt.s32.totalorder 0, %v1185
        %v1187 = vsel %vm1186, 0, %v1185
        %v1188 = vsub.s32 32, %v1187
        %v1189 = vshll.u32 %v1180, %v1187
        %v1190 = vshrl.u32 %v1172, %v1188
        %v1191 = vor.u32 %v1189, %v1190
        %v1192 = vsub.s32 4294967266, %v1187
        %v1193 = vadd.s32 %v1192, 127
        %v1194 = vshll.u32 %v1193, 23
        %v1195 = vor.u32 4788187, %v1194
        %v1196 = vand.u32 2147483647, %v1195
        %v1198 = vcvt.s32.f32 %v1191
        %v1199 = vmul.f32 %v1198, %v1196
        %v1200 = vxor.u32 %v1199, 2147483648
        %v1201 = vsel %vm1118, %v1200, %v1199
        %v1202 = vsub.s32 4, %v1178
        %v1203 = vsel %vm1118, %v1202, %v1178
        %v1204 = vsel %vm1117, %v1115, %v1201
        %v1205 = vsel %vm1117, 0, %v1203
        %v1206 = vcosq.f32.pop %v1204
        %v1207 = vsinq.f32.pop %v1204
        %vm1208 = vweird.f32 %v1115
        %v1209 = vand.u32 %v1205, 3
        %vm1210 = vcmp.lt.s32.totalorder %v1209, 2
        %vm1211 = vcmp.eq.s32.totalorder %v1209, 0
        %v1212 = vxor.u32 %v1207, 2147483648
        %v1213 = vsel %vm1211, %v1206, %v1212
        %vm1214 = vcmp.eq.s32.totalorder %v1209, 2
        %v1215 = vxor.u32 %v1206, 2147483648
        %v1216 = vsel %vm1214, %v1215, %v1207
        %v1217 = vsel %vm1210, %v1213, %v1216
        %v1218 = vsel %vm1208, nan, %v1217
        %v1219 = vadd.f32 %v1097, %v1218
        %v1220 = vmul.f32 %v1219, 0.25
        %s1221 = scalar_lea.vmem %s228, 8
        %1222 = vst [vmem:[%s1221] sm:$0xff] %v1220
        %s1223 = scalar_lea.vmem %s220, 64
        %v1224 = vld [vmem:[%s1223] sm:$0xff]
        %s1225 = scalar_lea.vmem %s220, 72
        %v1226 = vld [vmem:[%s1225] sm:$0xff]
        %s1227 = scalar_lea.vmem %s220, 80
        %v1228 = vld [vmem:[%s1227] sm:$0xff]
        %s1229 = scalar_lea.vmem %s220, 88
        %v1230 = vld [vmem:[%s1229] sm:$0xff]
        %s1231 = sld [smem:[#allocation2 + $0x20]]
        %v1232 = vstv %s1231
        %v1233 = vmul.f32 %v1232, %v1224
        %s1234 = sld [smem:[#allocation2 + $0x21]]
        %v1235 = vstv %s1234
        %v1236 = vmul.f32 %v1235, %v1226
        %v1237 = vadd.f32 %v1233, %v1236
        %s1238 = sld [smem:[#allocation2 + $0x22]]
        %v1239 = vstv %s1238
        %v1240 = vmul.f32 %v1239, %v1228
        %v1241 = vadd.f32 %v1237, %v1240
        %s1242 = sld [smem:[#allocation2 + $0x23]]
        %v1243 = vstv %s1242
        %v1244 = vmul.f32 %v1243, %v1230
        %v1245 = vadd.f32 %v1241, %v1244
        %s1246 = sld [smem:[#allocation4 + $0x8]]
        %v1247 = vstv %s1246
        %v1248 = vadd.f32 %v1245, %v1247
        %v1249 = vand.u32 2147483647, %v1248
        %vm1250 = vcmp.le.f32.partialorder %v1249, 0.7853982
        %vm1251 = vcmp.lt.s32.totalorder %v1248, 0
        %v1252 = vand.u32 %v1248, 2139095040
        %v1253 = vshrl.u32 %v1252, 23
        %v1254 = vsub.s32 %v1253, 127
        %v1255 = vand.u32 2147483647, %v1248
        %v1256 = vand.u32 %v1255, 8388607
        %v1257 = vor.u32 %v1256, 8388608
        %v1258 = vsub.s32 0, %v1257
        %v1259 = vadd.s32 %v1254, 1
        %vm1260 = vcmp.gt.s32.totalorder %v1259, 0
        %v1261 = vsel %vm1260, %v1259, 0
        %v1262 = vshrl.u32 %v1261, 5
        %v1263 = vand.u32 %v1261, 31
        %v1264 = vsub.s32 32, %v1263
        %v1265 = vshrl.u32 683565275, %v1264
        %v1266 = vshll.u32 683565275, %v1263
        %v1267 = vshrl.u32 2475754826, %v1264
        %v1268 = vor.u32 %v1266, %v1267
        %v1269 = vshll.u32 2475754826, %v1263
        %v1270 = vshrl.u32 2131351028, %v1264
        %v1271 = vor.u32 %v1269, %v1270
        %v1272 = vshll.u32 2131351028, %v1263
        %v1273 = vshrl.u32 2102212464, %v1264
        %v1274 = vor.u32 %v1272, %v1273
        %v1275 = vshll.u32 2102212464, %v1263
        %v1276 = vshrl.u32 920167782, %v1264
        %v1277 = vor.u32 %v1275, %v1276
        %v1278 = vshll.u32 920167782, %v1263
        %v1279 = vshrl.u32 1326507024, %v1264
        %v1280 = vor.u32 %v1278, %v1279
        %vm1281 = vcmp.lt.s32.totalorder %v1262, 1
        %vm1282 = vcmp.lt.s32.totalorder %v1262, 2
        %vm1283 = vcmp.lt.s32.totalorder %v1262, 3
        %vm1284 = vcmp.lt.s32.totalorder %v1262, 4
        %v1285 = vsel %vm1281, %v1265, %v1268
        %v1286 = vsel %vm1284, %v1274, 2102212464
        %v1287 = vsel %vm1283, %v1271, %v1286
        %v1288 = vsel %vm1282, %v1285, %v1287
        %v1289 = vsel %vm1281, %v1268, %v1271
        %v1290 = vsel %vm1284, %v1277, 920167782
        %v1291 = vsel %vm1283, %v1274, %v1290
        %v1292 = vsel %vm1282, %v1289, %v1291
        %v1293 = vsel %vm1281, %v1271, %v1274
        %v1294 = vsel %vm1284, %v1280, 1326507024
        %v1295 = vsel %vm1283, %v1277, %v1294
        %v1296 = vsel %vm1282, %v1293, %v1295
        %v1297 = vshll.u32 %v1257, 8
        %v1298 = vmul.u32.u64.compose %v1297, %v1296
        %v1299 = vextract.low.u32 %v1298
        %v1300 = vextract.high.u32 %v1298
        %v1301 = vmul.u32.u64.compose %v1297, %v1292
        %v1302 = vextract.low.u32 %v1301
        %v1303 = vextract.high.u32 %v1301
        %v1304 = vmul.u32 %v1297, %v1288
        %v1305 = vadd.s32 %v1300, %v1302
        %vm1306 = vc.u32 %v1300, %v1302
        %v1307 = vadd.s32 %v1303, 1
        %v1308 = vsel %vm1306, %v1307, %v1303
        %v1309 = vadd.s32 %v1304, %v1308
        %v1310 = vadd.s32 %v1309, 536870912
        %v1311 = vshrl.u32 %v1310, 30
        %v1312 = vshll.u32 %v1311, 30
        %v1313 = vsub.s32 %v1309, %v1312
        %vm1314 = vcmp.lt.s32.totalorder %v1313, 0
        %v1315 = vsub.s32 0, %v1313
        %v1316 = vsel %vm1314, %v1315, %v1313
        %v1317 = vclz %v1316
        %v1318 = vsub.s32 %v1317, 2
        %vm1319 = vcmp.gt.s32.totalorder 0, %v1318
        %v1320 = vsel %vm1319, 0, %v1318
        %v1321 = vsub.s32 32, %v1320
        %v1322 = vshll.u32 %v1313, %v1320
        %v1323 = vshrl.u32 %v1305, %v1321
        %v1324 = vor.u32 %v1322, %v1323
        %v1325 = vsub.s32 4294967266, %v1320
        %v1326 = vadd.s32 %v1325, 127
        %v1327 = vshll.u32 %v1326, 23
        %v1328 = vor.u32 4788187, %v1327
        %v1329 = vand.u32 2147483647, %v1328
        %v1331 = vcvt.s32.f32 %v1324
        %v1332 = vmul.f32 %v1331, %v1329
        %v1333 = vxor.u32 %v1332, 2147483648
        %v1334 = vsel %vm1251, %v1333, %v1332
        %v1335 = vsub.s32 4, %v1311
        %v1336 = vsel %vm1251, %v1335, %v1311
        %v1337 = vsel %vm1250, %v1248, %v1334
        %v1338 = vsel %vm1250, 0, %v1336
        %v1339 = vcosq.f32.pop %v1337
        %v1340 = vsinq.f32.pop %v1337
        %vm1341 = vweird.f32 %v1248
        %v1342 = vand.u32 %v1338, 3
        %vm1343 = vcmp.lt.s32.totalorder %v1342, 2
        %vm1344 = vcmp.eq.s32.totalorder %v1342, 0
        %v1345 = vxor.u32 %v1340, 2147483648
        %v1346 = vsel %vm1344, %v1339, %v1345
        %vm1347 = vcmp.eq.s32.totalorder %v1342, 2
        %v1348 = vxor.u32 %v1339, 2147483648
        %v1349 = vsel %vm1347, %v1348, %v1340
        %v1350 = vsel %vm1343, %v1346, %v1349
        %v1351 = vsel %vm1341, nan, %v1350
        %s1352 = sld [smem:[#allocation2 + $0x24]]
        %v1353 = vstv %s1352
        %v1354 = vmul.f32 %v1353, %v1224
        %s1355 = sld [smem:[#allocation2 + $0x25]]
        %v1356 = vstv %s1355
        %v1357 = vmul.f32 %v1356, %v1226
        %v1358 = vadd.f32 %v1354, %v1357
        %s1359 = sld [smem:[#allocation2 + $0x26]]
        %v1360 = vstv %s1359
        %v1361 = vmul.f32 %v1360, %v1228
        %v1362 = vadd.f32 %v1358, %v1361
        %s1363 = sld [smem:[#allocation2 + $0x27]]
        %v1364 = vstv %s1363
        %v1365 = vmul.f32 %v1364, %v1230
        %v1366 = vadd.f32 %v1362, %v1365
        %s1367 = sld [smem:[#allocation4 + $0x9]]
        %v1368 = vstv %s1367
        %v1369 = vadd.f32 %v1366, %v1368
        %v1370 = vand.u32 2147483647, %v1369
        %vm1371 = vcmp.le.f32.partialorder %v1370, 0.7853982
        %vm1372 = vcmp.lt.s32.totalorder %v1369, 0
        %v1373 = vand.u32 %v1369, 2139095040
        %v1374 = vshrl.u32 %v1373, 23
        %v1375 = vsub.s32 %v1374, 127
        %v1376 = vand.u32 2147483647, %v1369
        %v1377 = vand.u32 %v1376, 8388607
        %v1378 = vor.u32 %v1377, 8388608
        %v1379 = vsub.s32 0, %v1378
        %v1380 = vadd.s32 %v1375, 1
        %vm1381 = vcmp.gt.s32.totalorder %v1380, 0
        %v1382 = vsel %vm1381, %v1380, 0
        %v1383 = vshrl.u32 %v1382, 5
        %v1384 = vand.u32 %v1382, 31
        %v1385 = vsub.s32 32, %v1384
        %v1386 = vshrl.u32 683565275, %v1385
        %v1387 = vshll.u32 683565275, %v1384
        %v1388 = vshrl.u32 2475754826, %v1385
        %v1389 = vor.u32 %v1387, %v1388
        %v1390 = vshll.u32 2475754826, %v1384
        %v1391 = vshrl.u32 2131351028, %v1385
        %v1392 = vor.u32 %v1390, %v1391
        %v1393 = vshll.u32 2131351028, %v1384
        %v1394 = vshrl.u32 2102212464, %v1385
        %v1395 = vor.u32 %v1393, %v1394
        %v1396 = vshll.u32 2102212464, %v1384
        %v1397 = vshrl.u32 920167782, %v1385
        %v1398 = vor.u32 %v1396, %v1397
        %v1399 = vshll.u32 920167782, %v1384
        %v1400 = vshrl.u32 1326507024, %v1385
        %v1401 = vor.u32 %v1399, %v1400
        %vm1402 = vcmp.lt.s32.totalorder %v1383, 1
        %vm1403 = vcmp.lt.s32.totalorder %v1383, 2
        %vm1404 = vcmp.lt.s32.totalorder %v1383, 3
        %vm1405 = vcmp.lt.s32.totalorder %v1383, 4
        %v1406 = vsel %vm1402, %v1386, %v1389
        %v1407 = vsel %vm1405, %v1395, 2102212464
        %v1408 = vsel %vm1404, %v1392, %v1407
        %v1409 = vsel %vm1403, %v1406, %v1408
        %v1410 = vsel %vm1402, %v1389, %v1392
        %v1411 = vsel %vm1405, %v1398, 920167782
        %v1412 = vsel %vm1404, %v1395, %v1411
        %v1413 = vsel %vm1403, %v1410, %v1412
        %v1414 = vsel %vm1402, %v1392, %v1395
        %v1415 = vsel %vm1405, %v1401, 1326507024
        %v1416 = vsel %vm1404, %v1398, %v1415
        %v1417 = vsel %vm1403, %v1414, %v1416
        %v1418 = vshll.u32 %v1378, 8
        %v1419 = vmul.u32.u64.compose %v1418, %v1417
        %v1420 = vextract.low.u32 %v1419
        %v1421 = vextract.high.u32 %v1419
        %v1422 = vmul.u32.u64.compose %v1418, %v1413
        %v1423 = vextract.low.u32 %v1422
        %v1424 = vextract.high.u32 %v1422
        %v1425 = vmul.u32 %v1418, %v1409
        %v1426 = vadd.s32 %v1421, %v1423
        %vm1427 = vc.u32 %v1421, %v1423
        %v1428 = vadd.s32 %v1424, 1
        %v1429 = vsel %vm1427, %v1428, %v1424
        %v1430 = vadd.s32 %v1425, %v1429
        %v1431 = vadd.s32 %v1430, 536870912
        %v1432 = vshrl.u32 %v1431, 30
        %v1433 = vshll.u32 %v1432, 30
        %v1434 = vsub.s32 %v1430, %v1433
        %vm1435 = vcmp.lt.s32.totalorder %v1434, 0
        %v1436 = vsub.s32 0, %v1434
        %v1437 = vsel %vm1435, %v1436, %v1434
        %v1438 = vclz %v1437
        %v1439 = vsub.s32 %v1438, 2
        %vm1440 = vcmp.gt.s32.totalorder 0, %v1439
        %v1441 = vsel %vm1440, 0, %v1439
        %v1442 = vsub.s32 32, %v1441
        %v1443 = vshll.u32 %v1434, %v1441
        %v1444 = vshrl.u32 %v1426, %v1442
        %v1445 = vor.u32 %v1443, %v1444
        %v1446 = vsub.s32 4294967266, %v1441
        %v1447 = vadd.s32 %v1446, 127
        %v1448 = vshll.u32 %v1447, 23
        %v1449 = vor.u32 4788187, %v1448
        %v1450 = vand.u32 2147483647, %v1449
        %v1452 = vcvt.s32.f32 %v1445
        %v1453 = vmul.f32 %v1452, %v1450
        %v1454 = vxor.u32 %v1453, 2147483648
        %v1455 = vsel %vm1372, %v1454, %v1453
        %v1456 = vsub.s32 4, %v1432
        %v1457 = vsel %vm1372, %v1456, %v1432
        %v1458 = vsel %vm1371, %v1369, %v1455
        %v1459 = vsel %vm1371, 0, %v1457
        %v1460 = vcosq.f32.pop %v1458
        %v1461 = vsinq.f32.pop %v1458
        %vm1462 = vweird.f32 %v1369
        %v1463 = vand.u32 %v1459, 3
        %vm1464 = vcmp.lt.s32.totalorder %v1463, 2
        %vm1465 = vcmp.eq.s32.totalorder %v1463, 0
        %v1466 = vxor.u32 %v1461, 2147483648
        %v1467 = vsel %vm1465, %v1460, %v1466
        %vm1468 = vcmp.eq.s32.totalorder %v1463, 2
        %v1469 = vxor.u32 %v1460, 2147483648
        %v1470 = vsel %vm1468, %v1469, %v1461
        %v1471 = vsel %vm1464, %v1467, %v1470
        %v1472 = vsel %vm1462, nan, %v1471
        %v1473 = vadd.f32 %v1351, %v1472
        %s1474 = sld [smem:[#allocation2 + $0x28]]
        %v1475 = vstv %s1474
        %v1476 = vmul.f32 %v1475, %v1224
        %s1477 = sld [smem:[#allocation2 + $0x29]]
        %v1478 = vstv %s1477
        %v1479 = vmul.f32 %v1478, %v1226
        %v1480 = vadd.f32 %v1476, %v1479
        %s1481 = sld [smem:[#allocation2 + $0x2a]]
        %v1482 = vstv %s1481
        %v1483 = vmul.f32 %v1482, %v1228
        %v1484 = vadd.f32 %v1480, %v1483
        %s1485 = sld [smem:[#allocation2 + $0x2b]]
        %v1486 = vstv %s1485
        %v1487 = vmul.f32 %v1486, %v1230
        %v1488 = vadd.f32 %v1484, %v1487
        %s1489 = sld [smem:[#allocation4 + $0xa]]
        %v1490 = vstv %s1489
        %v1491 = vadd.f32 %v1488, %v1490
        %v1492 = vand.u32 2147483647, %v1491
        %vm1493 = vcmp.le.f32.partialorder %v1492, 0.7853982
        %vm1494 = vcmp.lt.s32.totalorder %v1491, 0
        %v1495 = vand.u32 %v1491, 2139095040
        %v1496 = vshrl.u32 %v1495, 23
        %v1497 = vsub.s32 %v1496, 127
        %v1498 = vand.u32 2147483647, %v1491
        %v1499 = vand.u32 %v1498, 8388607
        %v1500 = vor.u32 %v1499, 8388608
        %v1501 = vsub.s32 0, %v1500
        %v1502 = vadd.s32 %v1497, 1
        %vm1503 = vcmp.gt.s32.totalorder %v1502, 0
        %v1504 = vsel %vm1503, %v1502, 0
        %v1505 = vshrl.u32 %v1504, 5
        %v1506 = vand.u32 %v1504, 31
        %v1507 = vsub.s32 32, %v1506
        %v1508 = vshrl.u32 683565275, %v1507
        %v1509 = vshll.u32 683565275, %v1506
        %v1510 = vshrl.u32 2475754826, %v1507
        %v1511 = vor.u32 %v1509, %v1510
        %v1512 = vshll.u32 2475754826, %v1506
        %v1513 = vshrl.u32 2131351028, %v1507
        %v1514 = vor.u32 %v1512, %v1513
        %v1515 = vshll.u32 2131351028, %v1506
        %v1516 = vshrl.u32 2102212464, %v1507
        %v1517 = vor.u32 %v1515, %v1516
        %v1518 = vshll.u32 2102212464, %v1506
        %v1519 = vshrl.u32 920167782, %v1507
        %v1520 = vor.u32 %v1518, %v1519
        %v1521 = vshll.u32 920167782, %v1506
        %v1522 = vshrl.u32 1326507024, %v1507
        %v1523 = vor.u32 %v1521, %v1522
        %vm1524 = vcmp.lt.s32.totalorder %v1505, 1
        %vm1525 = vcmp.lt.s32.totalorder %v1505, 2
        %vm1526 = vcmp.lt.s32.totalorder %v1505, 3
        %vm1527 = vcmp.lt.s32.totalorder %v1505, 4
        %v1528 = vsel %vm1524, %v1508, %v1511
        %v1529 = vsel %vm1527, %v1517, 2102212464
        %v1530 = vsel %vm1526, %v1514, %v1529
        %v1531 = vsel %vm1525, %v1528, %v1530
        %v1532 = vsel %vm1524, %v1511, %v1514
        %v1533 = vsel %vm1527, %v1520, 920167782
        %v1534 = vsel %vm1526, %v1517, %v1533
        %v1535 = vsel %vm1525, %v1532, %v1534
        %v1536 = vsel %vm1524, %v1514, %v1517
        %v1537 = vsel %vm1527, %v1523, 1326507024
        %v1538 = vsel %vm1526, %v1520, %v1537
        %v1539 = vsel %vm1525, %v1536, %v1538
        %v1540 = vshll.u32 %v1500, 8
        %v1541 = vmul.u32.u64.compose %v1540, %v1539
        %v1542 = vextract.low.u32 %v1541
        %v1543 = vextract.high.u32 %v1541
        %v1544 = vmul.u32.u64.compose %v1540, %v1535
        %v1545 = vextract.low.u32 %v1544
        %v1546 = vextract.high.u32 %v1544
        %v1547 = vmul.u32 %v1540, %v1531
        %v1548 = vadd.s32 %v1543, %v1545
        %vm1549 = vc.u32 %v1543, %v1545
        %v1550 = vadd.s32 %v1546, 1
        %v1551 = vsel %vm1549, %v1550, %v1546
        %v1552 = vadd.s32 %v1547, %v1551
        %v1553 = vadd.s32 %v1552, 536870912
        %v1554 = vshrl.u32 %v1553, 30
        %v1555 = vshll.u32 %v1554, 30
        %v1556 = vsub.s32 %v1552, %v1555
        %vm1557 = vcmp.lt.s32.totalorder %v1556, 0
        %v1558 = vsub.s32 0, %v1556
        %v1559 = vsel %vm1557, %v1558, %v1556
        %v1560 = vclz %v1559
        %v1561 = vsub.s32 %v1560, 2
        %vm1562 = vcmp.gt.s32.totalorder 0, %v1561
        %v1563 = vsel %vm1562, 0, %v1561
        %v1564 = vsub.s32 32, %v1563
        %v1565 = vshll.u32 %v1556, %v1563
        %v1566 = vshrl.u32 %v1548, %v1564
        %v1567 = vor.u32 %v1565, %v1566
        %v1568 = vsub.s32 4294967266, %v1563
        %v1569 = vadd.s32 %v1568, 127
        %v1570 = vshll.u32 %v1569, 23
        %v1571 = vor.u32 4788187, %v1570
        %v1572 = vand.u32 2147483647, %v1571
        %v1574 = vcvt.s32.f32 %v1567
        %v1575 = vmul.f32 %v1574, %v1572
        %v1576 = vxor.u32 %v1575, 2147483648
        %v1577 = vsel %vm1494, %v1576, %v1575
        %v1578 = vsub.s32 4, %v1554
        %v1579 = vsel %vm1494, %v1578, %v1554
        %v1580 = vsel %vm1493, %v1491, %v1577
        %v1581 = vsel %vm1493, 0, %v1579
        %v1582 = vcosq.f32.pop %v1580
        %v1583 = vsinq.f32.pop %v1580
        %vm1584 = vweird.f32 %v1491
        %v1585 = vand.u32 %v1581, 3
        %vm1586 = vcmp.lt.s32.totalorder %v1585, 2
        %vm1587 = vcmp.eq.s32.totalorder %v1585, 0
        %v1588 = vxor.u32 %v1583, 2147483648
        %v1589 = vsel %vm1587, %v1582, %v1588
        %vm1590 = vcmp.eq.s32.totalorder %v1585, 2
        %v1591 = vxor.u32 %v1582, 2147483648
        %v1592 = vsel %vm1590, %v1591, %v1583
        %v1593 = vsel %vm1586, %v1589, %v1592
        %v1594 = vsel %vm1584, nan, %v1593
        %v1595 = vadd.f32 %v1473, %v1594
        %s1596 = sld [smem:[#allocation2 + $0x2c]]
        %v1597 = vstv %s1596
        %v1598 = vmul.f32 %v1597, %v1224
        %s1599 = sld [smem:[#allocation2 + $0x2d]]
        %v1600 = vstv %s1599
        %v1601 = vmul.f32 %v1600, %v1226
        %v1602 = vadd.f32 %v1598, %v1601
        %s1603 = sld [smem:[#allocation2 + $0x2e]]
        %v1604 = vstv %s1603
        %v1605 = vmul.f32 %v1604, %v1228
        %v1606 = vadd.f32 %v1602, %v1605
        %s1607 = sld [smem:[#allocation2 + $0x2f]]
        %v1608 = vstv %s1607
        %v1609 = vmul.f32 %v1608, %v1230
        %v1610 = vadd.f32 %v1606, %v1609
        %s1611 = sld [smem:[#allocation4 + $0xb]]
        %v1612 = vstv %s1611
        %v1613 = vadd.f32 %v1610, %v1612
        %v1614 = vand.u32 2147483647, %v1613
        %vm1615 = vcmp.le.f32.partialorder %v1614, 0.7853982
        %vm1616 = vcmp.lt.s32.totalorder %v1613, 0
        %v1617 = vand.u32 %v1613, 2139095040
        %v1618 = vshrl.u32 %v1617, 23
        %v1619 = vsub.s32 %v1618, 127
        %v1620 = vand.u32 2147483647, %v1613
        %v1621 = vand.u32 %v1620, 8388607
        %v1622 = vor.u32 %v1621, 8388608
        %v1623 = vsub.s32 0, %v1622
        %v1624 = vadd.s32 %v1619, 1
        %vm1625 = vcmp.gt.s32.totalorder %v1624, 0
        %v1626 = vsel %vm1625, %v1624, 0
        %v1627 = vshrl.u32 %v1626, 5
        %v1628 = vand.u32 %v1626, 31
        %v1629 = vsub.s32 32, %v1628
        %v1630 = vshrl.u32 683565275, %v1629
        %v1631 = vshll.u32 683565275, %v1628
        %v1632 = vshrl.u32 2475754826, %v1629
        %v1633 = vor.u32 %v1631, %v1632
        %v1634 = vshll.u32 2475754826, %v1628
        %v1635 = vshrl.u32 2131351028, %v1629
        %v1636 = vor.u32 %v1634, %v1635
        %v1637 = vshll.u32 2131351028, %v1628
        %v1638 = vshrl.u32 2102212464, %v1629
        %v1639 = vor.u32 %v1637, %v1638
        %v1640 = vshll.u32 2102212464, %v1628
        %v1641 = vshrl.u32 920167782, %v1629
        %v1642 = vor.u32 %v1640, %v1641
        %v1643 = vshll.u32 920167782, %v1628
        %v1644 = vshrl.u32 1326507024, %v1629
        %v1645 = vor.u32 %v1643, %v1644
        %vm1646 = vcmp.lt.s32.totalorder %v1627, 1
        %vm1647 = vcmp.lt.s32.totalorder %v1627, 2
        %vm1648 = vcmp.lt.s32.totalorder %v1627, 3
        %vm1649 = vcmp.lt.s32.totalorder %v1627, 4
        %v1650 = vsel %vm1646, %v1630, %v1633
        %v1651 = vsel %vm1649, %v1639, 2102212464
        %v1652 = vsel %vm1648, %v1636, %v1651
        %v1653 = vsel %vm1647, %v1650, %v1652
        %v1654 = vsel %vm1646, %v1633, %v1636
        %v1655 = vsel %vm1649, %v1642, 920167782
        %v1656 = vsel %vm1648, %v1639, %v1655
        %v1657 = vsel %vm1647, %v1654, %v1656
        %v1658 = vsel %vm1646, %v1636, %v1639
        %v1659 = vsel %vm1649, %v1645, 1326507024
        %v1660 = vsel %vm1648, %v1642, %v1659
        %v1661 = vsel %vm1647, %v1658, %v1660
        %v1662 = vshll.u32 %v1622, 8
        %v1663 = vmul.u32.u64.compose %v1662, %v1661
        %v1664 = vextract.low.u32 %v1663
        %v1665 = vextract.high.u32 %v1663
        %v1666 = vmul.u32.u64.compose %v1662, %v1657
        %v1667 = vextract.low.u32 %v1666
        %v1668 = vextract.high.u32 %v1666
        %v1669 = vmul.u32 %v1662, %v1653
        %v1670 = vadd.s32 %v1665, %v1667
        %vm1671 = vc.u32 %v1665, %v1667
        %v1672 = vadd.s32 %v1668, 1
        %v1673 = vsel %vm1671, %v1672, %v1668
        %v1674 = vadd.s32 %v1669, %v1673
        %v1675 = vadd.s32 %v1674, 536870912
        %v1676 = vshrl.u32 %v1675, 30
        %v1677 = vshll.u32 %v1676, 30
        %v1678 = vsub.s32 %v1674, %v1677
        %vm1679 = vcmp.lt.s32.totalorder %v1678, 0
        %v1680 = vsub.s32 0, %v1678
        %v1681 = vsel %vm1679, %v1680, %v1678
        %v1682 = vclz %v1681
        %v1683 = vsub.s32 %v1682, 2
        %vm1684 = vcmp.gt.s32.totalorder 0, %v1683
        %v1685 = vsel %vm1684, 0, %v1683
        %v1686 = vsub.s32 32, %v1685
        %v1687 = vshll.u32 %v1678, %v1685
        %v1688 = vshrl.u32 %v1670, %v1686
        %v1689 = vor.u32 %v1687, %v1688
        %v1690 = vsub.s32 4294967266, %v1685
        %v1691 = vadd.s32 %v1690, 127
        %v1692 = vshll.u32 %v1691, 23
        %v1693 = vor.u32 4788187, %v1692
        %v1694 = vand.u32 2147483647, %v1693
        %v1696 = vcvt.s32.f32 %v1689
        %v1697 = vmul.f32 %v1696, %v1694
        %v1698 = vxor.u32 %v1697, 2147483648
        %v1699 = vsel %vm1616, %v1698, %v1697
        %v1700 = vsub.s32 4, %v1676
        %v1701 = vsel %vm1616, %v1700, %v1676
        %v1702 = vsel %vm1615, %v1613, %v1699
        %v1703 = vsel %vm1615, 0, %v1701
        %v1704 = vcosq.f32.pop %v1702
        %v1705 = vsinq.f32.pop %v1702
        %vm1706 = vweird.f32 %v1613
        %v1707 = vand.u32 %v1703, 3
        %vm1708 = vcmp.lt.s32.totalorder %v1707, 2
        %vm1709 = vcmp.eq.s32.totalorder %v1707, 0
        %v1710 = vxor.u32 %v1705, 2147483648
        %v1711 = vsel %vm1709, %v1704, %v1710
        %vm1712 = vcmp.eq.s32.totalorder %v1707, 2
        %v1713 = vxor.u32 %v1704, 2147483648
        %v1714 = vsel %vm1712, %v1713, %v1705
        %v1715 = vsel %vm1708, %v1711, %v1714
        %v1716 = vsel %vm1706, nan, %v1715
        %v1717 = vadd.f32 %v1595, %v1716
        %v1718 = vmul.f32 %v1717, 0.25
        %s1719 = scalar_lea.vmem %s228, 16
        %1720 = vst [vmem:[%s1719] sm:$0xff] %v1718
        %s1721 = scalar_lea.vmem %s220, 96
        %v1722 = vld [vmem:[%s1721] sm:$0xff]
        %s1723 = scalar_lea.vmem %s220, 104
        %v1724 = vld [vmem:[%s1723] sm:$0xff]
        %s1725 = scalar_lea.vmem %s220, 112
        %v1726 = vld [vmem:[%s1725] sm:$0xff]
        %s1727 = scalar_lea.vmem %s220, 120
        %v1728 = vld [vmem:[%s1727] sm:$0xff]
        %s1729 = sld [smem:[#allocation2 + $0x30]]
        %v1730 = vstv %s1729
        %v1731 = vmul.f32 %v1730, %v1722
        %s1732 = sld [smem:[#allocation2 + $0x31]]
        %v1733 = vstv %s1732
        %v1734 = vmul.f32 %v1733, %v1724
        %v1735 = vadd.f32 %v1731, %v1734
        %s1736 = sld [smem:[#allocation2 + $0x32]]
        %v1737 = vstv %s1736
        %v1738 = vmul.f32 %v1737, %v1726
        %v1739 = vadd.f32 %v1735, %v1738
        %s1740 = sld [smem:[#allocation2 + $0x33]]
        %v1741 = vstv %s1740
        %v1742 = vmul.f32 %v1741, %v1728
        %v1743 = vadd.f32 %v1739, %v1742
        %s1744 = sld [smem:[#allocation4 + $0xc]]
        %v1745 = vstv %s1744
        %v1746 = vadd.f32 %v1743, %v1745
        %v1747 = vand.u32 2147483647, %v1746
        %vm1748 = vcmp.le.f32.partialorder %v1747, 0.7853982
        %vm1749 = vcmp.lt.s32.totalorder %v1746, 0
        %v1750 = vand.u32 %v1746, 2139095040
        %v1751 = vshrl.u32 %v1750, 23
        %v1752 = vsub.s32 %v1751, 127
        %v1753 = vand.u32 2147483647, %v1746
        %v1754 = vand.u32 %v1753, 8388607
        %v1755 = vor.u32 %v1754, 8388608
        %v1756 = vsub.s32 0, %v1755
        %v1757 = vadd.s32 %v1752, 1
        %vm1758 = vcmp.gt.s32.totalorder %v1757, 0
        %v1759 = vsel %vm1758, %v1757, 0
        %v1760 = vshrl.u32 %v1759, 5
        %v1761 = vand.u32 %v1759, 31
        %v1762 = vsub.s32 32, %v1761
        %v1763 = vshrl.u32 683565275, %v1762
        %v1764 = vshll.u32 683565275, %v1761
        %v1765 = vshrl.u32 2475754826, %v1762
        %v1766 = vor.u32 %v1764, %v1765
        %v1767 = vshll.u32 2475754826, %v1761
        %v1768 = vshrl.u32 2131351028, %v1762
        %v1769 = vor.u32 %v1767, %v1768
        %v1770 = vshll.u32 2131351028, %v1761
        %v1771 = vshrl.u32 2102212464, %v1762
        %v1772 = vor.u32 %v1770, %v1771
        %v1773 = vshll.u32 2102212464, %v1761
        %v1774 = vshrl.u32 920167782, %v1762
        %v1775 = vor.u32 %v1773, %v1774
        %v1776 = vshll.u32 920167782, %v1761
        %v1777 = vshrl.u32 1326507024, %v1762
        %v1778 = vor.u32 %v1776, %v1777
        %vm1779 = vcmp.lt.s32.totalorder %v1760, 1
        %vm1780 = vcmp.lt.s32.totalorder %v1760, 2
        %vm1781 = vcmp.lt.s32.totalorder %v1760, 3
        %vm1782 = vcmp.lt.s32.totalorder %v1760, 4
        %v1783 = vsel %vm1779, %v1763, %v1766
        %v1784 = vsel %vm1782, %v1772, 2102212464
        %v1785 = vsel %vm1781, %v1769, %v1784
        %v1786 = vsel %vm1780, %v1783, %v1785
        %v1787 = vsel %vm1779, %v1766, %v1769
        %v1788 = vsel %vm1782, %v1775, 920167782
        %v1789 = vsel %vm1781, %v1772, %v1788
        %v1790 = vsel %vm1780, %v1787, %v1789
        %v1791 = vsel %vm1779, %v1769, %v1772
        %v1792 = vsel %vm1782, %v1778, 1326507024
        %v1793 = vsel %vm1781, %v1775, %v1792
        %v1794 = vsel %vm1780, %v1791, %v1793
        %v1795 = vshll.u32 %v1755, 8
        %v1796 = vmul.u32.u64.compose %v1795, %v1794
        %v1797 = vextract.low.u32 %v1796
        %v1798 = vextract.high.u32 %v1796
        %v1799 = vmul.u32.u64.compose %v1795, %v1790
        %v1800 = vextract.low.u32 %v1799
        %v1801 = vextract.high.u32 %v1799
        %v1802 = vmul.u32 %v1795, %v1786
        %v1803 = vadd.s32 %v1798, %v1800
        %vm1804 = vc.u32 %v1798, %v1800
        %v1805 = vadd.s32 %v1801, 1
        %v1806 = vsel %vm1804, %v1805, %v1801
        %v1807 = vadd.s32 %v1802, %v1806
        %v1808 = vadd.s32 %v1807, 536870912
        %v1809 = vshrl.u32 %v1808, 30
        %v1810 = vshll.u32 %v1809, 30
        %v1811 = vsub.s32 %v1807, %v1810
        %vm1812 = vcmp.lt.s32.totalorder %v1811, 0
        %v1813 = vsub.s32 0, %v1811
        %v1814 = vsel %vm1812, %v1813, %v1811
        %v1815 = vclz %v1814
        %v1816 = vsub.s32 %v1815, 2
        %vm1817 = vcmp.gt.s32.totalorder 0, %v1816
        %v1818 = vsel %vm1817, 0, %v1816
        %v1819 = vsub.s32 32, %v1818
        %v1820 = vshll.u32 %v1811, %v1818
        %v1821 = vshrl.u32 %v1803, %v1819
        %v1822 = vor.u32 %v1820, %v1821
        %v1823 = vsub.s32 4294967266, %v1818
        %v1824 = vadd.s32 %v1823, 127
        %v1825 = vshll.u32 %v1824, 23
        %v1826 = vor.u32 4788187, %v1825
        %v1827 = vand.u32 2147483647, %v1826
        %v1829 = vcvt.s32.f32 %v1822
        %v1830 = vmul.f32 %v1829, %v1827
        %v1831 = vxor.u32 %v1830, 2147483648
        %v1832 = vsel %vm1749, %v1831, %v1830
        %v1833 = vsub.s32 4, %v1809
        %v1834 = vsel %vm1749, %v1833, %v1809
        %v1835 = vsel %vm1748, %v1746, %v1832
        %v1836 = vsel %vm1748, 0, %v1834
        %v1837 = vcosq.f32.pop %v1835
        %v1838 = vsinq.f32.pop %v1835
        %vm1839 = vweird.f32 %v1746
        %v1840 = vand.u32 %v1836, 3
        %vm1841 = vcmp.lt.s32.totalorder %v1840, 2
        %vm1842 = vcmp.eq.s32.totalorder %v1840, 0
        %v1843 = vxor.u32 %v1838, 2147483648
        %v1844 = vsel %vm1842, %v1837, %v1843
        %vm1845 = vcmp.eq.s32.totalorder %v1840, 2
        %v1846 = vxor.u32 %v1837, 2147483648
        %v1847 = vsel %vm1845, %v1846, %v1838
        %v1848 = vsel %vm1841, %v1844, %v1847
        %v1849 = vsel %vm1839, nan, %v1848
        %s1850 = sld [smem:[#allocation2 + $0x34]]
        %v1851 = vstv %s1850
        %v1852 = vmul.f32 %v1851, %v1722
        %s1853 = sld [smem:[#allocation2 + $0x35]]
        %v1854 = vstv %s1853
        %v1855 = vmul.f32 %v1854, %v1724
        %v1856 = vadd.f32 %v1852, %v1855
        %s1857 = sld [smem:[#allocation2 + $0x36]]
        %v1858 = vstv %s1857
        %v1859 = vmul.f32 %v1858, %v1726
        %v1860 = vadd.f32 %v1856, %v1859
        %s1861 = sld [smem:[#allocation2 + $0x37]]
        %v1862 = vstv %s1861
        %v1863 = vmul.f32 %v1862, %v1728
        %v1864 = vadd.f32 %v1860, %v1863
        %s1865 = sld [smem:[#allocation4 + $0xd]]
        %v1866 = vstv %s1865
        %v1867 = vadd.f32 %v1864, %v1866
        %v1868 = vand.u32 2147483647, %v1867
        %vm1869 = vcmp.le.f32.partialorder %v1868, 0.7853982
        %vm1870 = vcmp.lt.s32.totalorder %v1867, 0
        %v1871 = vand.u32 %v1867, 2139095040
        %v1872 = vshrl.u32 %v1871, 23
        %v1873 = vsub.s32 %v1872, 127
        %v1874 = vand.u32 2147483647, %v1867
        %v1875 = vand.u32 %v1874, 8388607
        %v1876 = vor.u32 %v1875, 8388608
        %v1877 = vsub.s32 0, %v1876
        %v1878 = vadd.s32 %v1873, 1
        %vm1879 = vcmp.gt.s32.totalorder %v1878, 0
        %v1880 = vsel %vm1879, %v1878, 0
        %v1881 = vshrl.u32 %v1880, 5
        %v1882 = vand.u32 %v1880, 31
        %v1883 = vsub.s32 32, %v1882
        %v1884 = vshrl.u32 683565275, %v1883
        %v1885 = vshll.u32 683565275, %v1882
        %v1886 = vshrl.u32 2475754826, %v1883
        %v1887 = vor.u32 %v1885, %v1886
        %v1888 = vshll.u32 2475754826, %v1882
        %v1889 = vshrl.u32 2131351028, %v1883
        %v1890 = vor.u32 %v1888, %v1889
        %v1891 = vshll.u32 2131351028, %v1882
        %v1892 = vshrl.u32 2102212464, %v1883
        %v1893 = vor.u32 %v1891, %v1892
        %v1894 = vshll.u32 2102212464, %v1882
        %v1895 = vshrl.u32 920167782, %v1883
        %v1896 = vor.u32 %v1894, %v1895
        %v1897 = vshll.u32 920167782, %v1882
        %v1898 = vshrl.u32 1326507024, %v1883
        %v1899 = vor.u32 %v1897, %v1898
        %vm1900 = vcmp.lt.s32.totalorder %v1881, 1
        %vm1901 = vcmp.lt.s32.totalorder %v1881, 2
        %vm1902 = vcmp.lt.s32.totalorder %v1881, 3
        %vm1903 = vcmp.lt.s32.totalorder %v1881, 4
        %v1904 = vsel %vm1900, %v1884, %v1887
        %v1905 = vsel %vm1903, %v1893, 2102212464
        %v1906 = vsel %vm1902, %v1890, %v1905
        %v1907 = vsel %vm1901, %v1904, %v1906
        %v1908 = vsel %vm1900, %v1887, %v1890
        %v1909 = vsel %vm1903, %v1896, 920167782
        %v1910 = vsel %vm1902, %v1893, %v1909
        %v1911 = vsel %vm1901, %v1908, %v1910
        %v1912 = vsel %vm1900, %v1890, %v1893
        %v1913 = vsel %vm1903, %v1899, 1326507024
        %v1914 = vsel %vm1902, %v1896, %v1913
        %v1915 = vsel %vm1901, %v1912, %v1914
        %v1916 = vshll.u32 %v1876, 8
        %v1917 = vmul.u32.u64.compose %v1916, %v1915
        %v1918 = vextract.low.u32 %v1917
        %v1919 = vextract.high.u32 %v1917
        %v1920 = vmul.u32.u64.compose %v1916, %v1911
        %v1921 = vextract.low.u32 %v1920
        %v1922 = vextract.high.u32 %v1920
        %v1923 = vmul.u32 %v1916, %v1907
        %v1924 = vadd.s32 %v1919, %v1921
        %vm1925 = vc.u32 %v1919, %v1921
        %v1926 = vadd.s32 %v1922, 1
        %v1927 = vsel %vm1925, %v1926, %v1922
        %v1928 = vadd.s32 %v1923, %v1927
        %v1929 = vadd.s32 %v1928, 536870912
        %v1930 = vshrl.u32 %v1929, 30
        %v1931 = vshll.u32 %v1930, 30
        %v1932 = vsub.s32 %v1928, %v1931
        %vm1933 = vcmp.lt.s32.totalorder %v1932, 0
        %v1934 = vsub.s32 0, %v1932
        %v1935 = vsel %vm1933, %v1934, %v1932
        %v1936 = vclz %v1935
        %v1937 = vsub.s32 %v1936, 2
        %vm1938 = vcmp.gt.s32.totalorder 0, %v1937
        %v1939 = vsel %vm1938, 0, %v1937
        %v1940 = vsub.s32 32, %v1939
        %v1941 = vshll.u32 %v1932, %v1939
        %v1942 = vshrl.u32 %v1924, %v1940
        %v1943 = vor.u32 %v1941, %v1942
        %v1944 = vsub.s32 4294967266, %v1939
        %v1945 = vadd.s32 %v1944, 127
        %v1946 = vshll.u32 %v1945, 23
        %v1947 = vor.u32 4788187, %v1946
        %v1948 = vand.u32 2147483647, %v1947
        %v1950 = vcvt.s32.f32 %v1943
        %v1951 = vmul.f32 %v1950, %v1948
        %v1952 = vxor.u32 %v1951, 2147483648
        %v1953 = vsel %vm1870, %v1952, %v1951
        %v1954 = vsub.s32 4, %v1930
        %v1955 = vsel %vm1870, %v1954, %v1930
        %v1956 = vsel %vm1869, %v1867, %v1953
        %v1957 = vsel %vm1869, 0, %v1955
        %v1958 = vcosq.f32.pop %v1956
        %v1959 = vsinq.f32.pop %v1956
        %vm1960 = vweird.f32 %v1867
        %v1961 = vand.u32 %v1957, 3
        %vm1962 = vcmp.lt.s32.totalorder %v1961, 2
        %vm1963 = vcmp.eq.s32.totalorder %v1961, 0
        %v1964 = vxor.u32 %v1959, 2147483648
        %v1965 = vsel %vm1963, %v1958, %v1964
        %vm1966 = vcmp.eq.s32.totalorder %v1961, 2
        %v1967 = vxor.u32 %v1958, 2147483648
        %v1968 = vsel %vm1966, %v1967, %v1959
        %v1969 = vsel %vm1962, %v1965, %v1968
        %v1970 = vsel %vm1960, nan, %v1969
        %v1971 = vadd.f32 %v1849, %v1970
        %s1972 = sld [smem:[#allocation2 + $0x38]]
        %v1973 = vstv %s1972
        %v1974 = vmul.f32 %v1973, %v1722
        %s1975 = sld [smem:[#allocation2 + $0x39]]
        %v1976 = vstv %s1975
        %v1977 = vmul.f32 %v1976, %v1724
        %v1978 = vadd.f32 %v1974, %v1977
        %s1979 = sld [smem:[#allocation2 + $0x3a]]
        %v1980 = vstv %s1979
        %v1981 = vmul.f32 %v1980, %v1726
        %v1982 = vadd.f32 %v1978, %v1981
        %s1983 = sld [smem:[#allocation2 + $0x3b]]
        %v1984 = vstv %s1983
        %v1985 = vmul.f32 %v1984, %v1728
        %v1986 = vadd.f32 %v1982, %v1985
        %s1987 = sld [smem:[#allocation4 + $0xe]]
        %v1988 = vstv %s1987
        %v1989 = vadd.f32 %v1986, %v1988
        %v1990 = vand.u32 2147483647, %v1989
        %vm1991 = vcmp.le.f32.partialorder %v1990, 0.7853982
        %vm1992 = vcmp.lt.s32.totalorder %v1989, 0
        %v1993 = vand.u32 %v1989, 2139095040
        %v1994 = vshrl.u32 %v1993, 23
        %v1995 = vsub.s32 %v1994, 127
        %v1996 = vand.u32 2147483647, %v1989
        %v1997 = vand.u32 %v1996, 8388607
        %v1998 = vor.u32 %v1997, 8388608
        %v1999 = vsub.s32 0, %v1998
        %v2000 = vadd.s32 %v1995, 1
        %vm2001 = vcmp.gt.s32.totalorder %v2000, 0
        %v2002 = vsel %vm2001, %v2000, 0
        %v2003 = vshrl.u32 %v2002, 5
        %v2004 = vand.u32 %v2002, 31
        %v2005 = vsub.s32 32, %v2004
        %v2006 = vshrl.u32 683565275, %v2005
        %v2007 = vshll.u32 683565275, %v2004
        %v2008 = vshrl.u32 2475754826, %v2005
        %v2009 = vor.u32 %v2007, %v2008
        %v2010 = vshll.u32 2475754826, %v2004
        %v2011 = vshrl.u32 2131351028, %v2005
        %v2012 = vor.u32 %v2010, %v2011
        %v2013 = vshll.u32 2131351028, %v2004
        %v2014 = vshrl.u32 2102212464, %v2005
        %v2015 = vor.u32 %v2013, %v2014
        %v2016 = vshll.u32 2102212464, %v2004
        %v2017 = vshrl.u32 920167782, %v2005
        %v2018 = vor.u32 %v2016, %v2017
        %v2019 = vshll.u32 920167782, %v2004
        %v2020 = vshrl.u32 1326507024, %v2005
        %v2021 = vor.u32 %v2019, %v2020
        %vm2022 = vcmp.lt.s32.totalorder %v2003, 1
        %vm2023 = vcmp.lt.s32.totalorder %v2003, 2
        %vm2024 = vcmp.lt.s32.totalorder %v2003, 3
        %vm2025 = vcmp.lt.s32.totalorder %v2003, 4
        %v2026 = vsel %vm2022, %v2006, %v2009
        %v2027 = vsel %vm2025, %v2015, 2102212464
        %v2028 = vsel %vm2024, %v2012, %v2027
        %v2029 = vsel %vm2023, %v2026, %v2028
        %v2030 = vsel %vm2022, %v2009, %v2012
        %v2031 = vsel %vm2025, %v2018, 920167782
        %v2032 = vsel %vm2024, %v2015, %v2031
        %v2033 = vsel %vm2023, %v2030, %v2032
        %v2034 = vsel %vm2022, %v2012, %v2015
        %v2035 = vsel %vm2025, %v2021, 1326507024
        %v2036 = vsel %vm2024, %v2018, %v2035
        %v2037 = vsel %vm2023, %v2034, %v2036
        %v2038 = vshll.u32 %v1998, 8
        %v2039 = vmul.u32.u64.compose %v2038, %v2037
        %v2040 = vextract.low.u32 %v2039
        %v2041 = vextract.high.u32 %v2039
        %v2042 = vmul.u32.u64.compose %v2038, %v2033
        %v2043 = vextract.low.u32 %v2042
        %v2044 = vextract.high.u32 %v2042
        %v2045 = vmul.u32 %v2038, %v2029
        %v2046 = vadd.s32 %v2041, %v2043
        %vm2047 = vc.u32 %v2041, %v2043
        %v2048 = vadd.s32 %v2044, 1
        %v2049 = vsel %vm2047, %v2048, %v2044
        %v2050 = vadd.s32 %v2045, %v2049
        %v2051 = vadd.s32 %v2050, 536870912
        %v2052 = vshrl.u32 %v2051, 30
        %v2053 = vshll.u32 %v2052, 30
        %v2054 = vsub.s32 %v2050, %v2053
        %vm2055 = vcmp.lt.s32.totalorder %v2054, 0
        %v2056 = vsub.s32 0, %v2054
        %v2057 = vsel %vm2055, %v2056, %v2054
        %v2058 = vclz %v2057
        %v2059 = vsub.s32 %v2058, 2
        %vm2060 = vcmp.gt.s32.totalorder 0, %v2059
        %v2061 = vsel %vm2060, 0, %v2059
        %v2062 = vsub.s32 32, %v2061
        %v2063 = vshll.u32 %v2054, %v2061
        %v2064 = vshrl.u32 %v2046, %v2062
        %v2065 = vor.u32 %v2063, %v2064
        %v2066 = vsub.s32 4294967266, %v2061
        %v2067 = vadd.s32 %v2066, 127
        %v2068 = vshll.u32 %v2067, 23
        %v2069 = vor.u32 4788187, %v2068
        %v2070 = vand.u32 2147483647, %v2069
        %v2072 = vcvt.s32.f32 %v2065
        %v2073 = vmul.f32 %v2072, %v2070
        %v2074 = vxor.u32 %v2073, 2147483648
        %v2075 = vsel %vm1992, %v2074, %v2073
        %v2076 = vsub.s32 4, %v2052
        %v2077 = vsel %vm1992, %v2076, %v2052
        %v2078 = vsel %vm1991, %v1989, %v2075
        %v2079 = vsel %vm1991, 0, %v2077
        %v2080 = vcosq.f32.pop %v2078
        %v2081 = vsinq.f32.pop %v2078
        %vm2082 = vweird.f32 %v1989
        %v2083 = vand.u32 %v2079, 3
        %vm2084 = vcmp.lt.s32.totalorder %v2083, 2
        %vm2085 = vcmp.eq.s32.totalorder %v2083, 0
        %v2086 = vxor.u32 %v2081, 2147483648
        %v2087 = vsel %vm2085, %v2080, %v2086
        %vm2088 = vcmp.eq.s32.totalorder %v2083, 2
        %v2089 = vxor.u32 %v2080, 2147483648
        %v2090 = vsel %vm2088, %v2089, %v2081
        %v2091 = vsel %vm2084, %v2087, %v2090
        %v2092 = vsel %vm2082, nan, %v2091
        %v2093 = vadd.f32 %v1971, %v2092
        %s2094 = sld [smem:[#allocation2 + $0x3c]]
        %v2095 = vstv %s2094
        %v2096 = vmul.f32 %v2095, %v1722
        %s2097 = sld [smem:[#allocation2 + $0x3d]]
        %v2098 = vstv %s2097
        %v2099 = vmul.f32 %v2098, %v1724
        %v2100 = vadd.f32 %v2096, %v2099
        %s2101 = sld [smem:[#allocation2 + $0x3e]]
        %v2102 = vstv %s2101
        %v2103 = vmul.f32 %v2102, %v1726
        %v2104 = vadd.f32 %v2100, %v2103
        %s2105 = sld [smem:[#allocation2 + $0x3f]]
        %v2106 = vstv %s2105
        %v2107 = vmul.f32 %v2106, %v1728
        %v2108 = vadd.f32 %v2104, %v2107
        %s2109 = sld [smem:[#allocation4 + $0xf]]
        %v2110 = vstv %s2109
        %v2111 = vadd.f32 %v2108, %v2110
        %v2112 = vand.u32 2147483647, %v2111
        %vm2113 = vcmp.le.f32.partialorder %v2112, 0.7853982
        %vm2114 = vcmp.lt.s32.totalorder %v2111, 0
        %v2115 = vand.u32 %v2111, 2139095040
        %v2116 = vshrl.u32 %v2115, 23
        %v2117 = vsub.s32 %v2116, 127
        %v2118 = vand.u32 2147483647, %v2111
        %v2119 = vand.u32 %v2118, 8388607
        %v2120 = vor.u32 %v2119, 8388608
        %v2121 = vsub.s32 0, %v2120
        %v2122 = vadd.s32 %v2117, 1
        %vm2123 = vcmp.gt.s32.totalorder %v2122, 0
        %v2124 = vsel %vm2123, %v2122, 0
        %v2125 = vshrl.u32 %v2124, 5
        %v2126 = vand.u32 %v2124, 31
        %v2127 = vsub.s32 32, %v2126
        %v2128 = vshrl.u32 683565275, %v2127
        %v2129 = vshll.u32 683565275, %v2126
        %v2130 = vshrl.u32 2475754826, %v2127
        %v2131 = vor.u32 %v2129, %v2130
        %v2132 = vshll.u32 2475754826, %v2126
        %v2133 = vshrl.u32 2131351028, %v2127
        %v2134 = vor.u32 %v2132, %v2133
        %v2135 = vshll.u32 2131351028, %v2126
        %v2136 = vshrl.u32 2102212464, %v2127
        %v2137 = vor.u32 %v2135, %v2136
        %v2138 = vshll.u32 2102212464, %v2126
        %v2139 = vshrl.u32 920167782, %v2127
        %v2140 = vor.u32 %v2138, %v2139
        %v2141 = vshll.u32 920167782, %v2126
        %v2142 = vshrl.u32 1326507024, %v2127
        %v2143 = vor.u32 %v2141, %v2142
        %vm2144 = vcmp.lt.s32.totalorder %v2125, 1
        %vm2145 = vcmp.lt.s32.totalorder %v2125, 2
        %vm2146 = vcmp.lt.s32.totalorder %v2125, 3
        %vm2147 = vcmp.lt.s32.totalorder %v2125, 4
        %v2148 = vsel %vm2144, %v2128, %v2131
        %v2149 = vsel %vm2147, %v2137, 2102212464
        %v2150 = vsel %vm2146, %v2134, %v2149
        %v2151 = vsel %vm2145, %v2148, %v2150
        %v2152 = vsel %vm2144, %v2131, %v2134
        %v2153 = vsel %vm2147, %v2140, 920167782
        %v2154 = vsel %vm2146, %v2137, %v2153
        %v2155 = vsel %vm2145, %v2152, %v2154
        %v2156 = vsel %vm2144, %v2134, %v2137
        %v2157 = vsel %vm2147, %v2143, 1326507024
        %v2158 = vsel %vm2146, %v2140, %v2157
        %v2159 = vsel %vm2145, %v2156, %v2158
        %v2160 = vshll.u32 %v2120, 8
        %v2161 = vmul.u32.u64.compose %v2160, %v2159
        %v2162 = vextract.low.u32 %v2161
        %v2163 = vextract.high.u32 %v2161
        %v2164 = vmul.u32.u64.compose %v2160, %v2155
        %v2165 = vextract.low.u32 %v2164
        %v2166 = vextract.high.u32 %v2164
        %v2167 = vmul.u32 %v2160, %v2151
        %v2168 = vadd.s32 %v2163, %v2165
        %vm2169 = vc.u32 %v2163, %v2165
        %v2170 = vadd.s32 %v2166, 1
        %v2171 = vsel %vm2169, %v2170, %v2166
        %v2172 = vadd.s32 %v2167, %v2171
        %v2173 = vadd.s32 %v2172, 536870912
        %v2174 = vshrl.u32 %v2173, 30
        %v2175 = vshll.u32 %v2174, 30
        %v2176 = vsub.s32 %v2172, %v2175
        %vm2177 = vcmp.lt.s32.totalorder %v2176, 0
        %v2178 = vsub.s32 0, %v2176
        %v2179 = vsel %vm2177, %v2178, %v2176
        %v2180 = vclz %v2179
        %v2181 = vsub.s32 %v2180, 2
        %vm2182 = vcmp.gt.s32.totalorder 0, %v2181
        %v2183 = vsel %vm2182, 0, %v2181
        %v2184 = vsub.s32 32, %v2183
        %v2185 = vshll.u32 %v2176, %v2183
        %v2186 = vshrl.u32 %v2168, %v2184
        %v2187 = vor.u32 %v2185, %v2186
        %v2188 = vsub.s32 4294967266, %v2183
        %v2189 = vadd.s32 %v2188, 127
        %v2190 = vshll.u32 %v2189, 23
        %v2191 = vor.u32 4788187, %v2190
        %v2192 = vand.u32 2147483647, %v2191
        %v2194 = vcvt.s32.f32 %v2187
        %v2195 = vmul.f32 %v2194, %v2192
        %v2196 = vxor.u32 %v2195, 2147483648
        %v2197 = vsel %vm2114, %v2196, %v2195
        %v2198 = vsub.s32 4, %v2174
        %v2199 = vsel %vm2114, %v2198, %v2174
        %v2200 = vsel %vm2113, %v2111, %v2197
        %v2201 = vsel %vm2113, 0, %v2199
        %v2202 = vcosq.f32.pop %v2200
        %v2203 = vsinq.f32.pop %v2200
        %vm2204 = vweird.f32 %v2111
        %v2205 = vand.u32 %v2201, 3
        %vm2206 = vcmp.lt.s32.totalorder %v2205, 2
        %vm2207 = vcmp.eq.s32.totalorder %v2205, 0
        %v2208 = vxor.u32 %v2203, 2147483648
        %v2209 = vsel %vm2207, %v2202, %v2208
        %vm2210 = vcmp.eq.s32.totalorder %v2205, 2
        %v2211 = vxor.u32 %v2202, 2147483648
        %v2212 = vsel %vm2210, %v2211, %v2203
        %v2213 = vsel %vm2206, %v2209, %v2212
        %v2214 = vsel %vm2204, nan, %v2213
        %v2215 = vadd.f32 %v2093, %v2214
        %v2216 = vmul.f32 %v2215, 0.25
        %s2217 = scalar_lea.vmem %s228, 24
        %2218 = vst [vmem:[%s2217] sm:$0xff] %v2216
        %p2219 = scmp.lt.s32.totalorder %s20, 1
        %s2220 = scalar_select %p2219, %s20, 1
        %p2221 = scmp.lt.s32.totalorder %s21, 0
        %s2222 = scalar_select %p2221, %s21, 0
        %s2223 = smul.addr %s2220, 4
        %s2224 = sadd.s32 %s2222, %s2223
        %s2225 = smul.addr %s2224, 8
        %s2226 = scalar_lea.vmem %s3, %s2225
        // Predicated region
        $region41: #{quconv2d_mc_forward.1} parent=31 // pred_check
          %p2227 = pneg %p118
        $region42: #{quconv2d_mc_forward.1} parent=31 // pred_check_branch
          %2229 = sbr.rel (%p2227) target = $region44
        $region43: #{quconv2d_mc_forward.1} parent=31 // pred_region
          _
        $region44: #{quconv2d_mc_forward.1} parent=31 // pred_fallthru
          _
      $region32: #{quconv2d_mc_forward.1} parent=5 // pred_fallthru
        _
      %p2230 = scmp.le.s32.totalorder 2, %s11
      // Predicated region
      $region45: #{quconv2d_mc_forward.1} parent=5 // pred_check
        %p2231 = pneg %p2230
      $region46: #{quconv2d_mc_forward.1} parent=5 // pred_check_branch
        %2233 = sbr.rel (%p2231) target = $region48
      $region47: #{quconv2d_mc_forward.1} parent=5 // pred_region
        %s2234 = ssub.s32 %s11, 2
        // Predicated region
        $region49: #{quconv2d_mc_forward.1} parent=47 // pred_check
          %p2235 = pneg %p124
        $region50: #{quconv2d_mc_forward.1} parent=47 // pred_check_branch
          %2237 = sbr.rel (%p2235) target = $region52
        $region51: #{quconv2d_mc_forward.1} parent=47 // pred_region
          %p2238 = scmp.lt.s32.totalorder %s22, 1
          %s2239 = scalar_select %p2238, %s22, 1
          %p2240 = scmp.lt.s32.totalorder %s23, 0
          %s2241 = scalar_select %p2240, %s23, 0
          %s2242 = smul.addr %s2239, 4
          %s2243 = sadd.s32 %s2241, %s2242
          %s2244 = smul.addr %s2243, 8
          %s2245 = scalar_lea.vmem %s3, %s2244
        $region52: #{quconv2d_mc_forward.1} parent=47 // pred_fallthru
          _
      $region48: #{quconv2d_mc_forward.1} parent=5 // pred_fallthru
        _
    $region6: #{quconv2d_mc_forward.1} parent=1 // loop_footer
      %s15 = sadd.s32 1, %s11
    $region7: #{quconv2d_mc_forward.1} parent=1 // loop_footer_branch
      %10 = sbr.rel target = $region3
    $region8: #{quconv2d_mc_forward.1} parent=1 // loop_exit
      _
    %2246 = vsyncpa [#allocation3], 1
    %s2247 = scalar_lea.sflag [#allocation3], 1
    %2248 = vsyncpa %s2247, 1
    %2249 = vsyncpa [#allocation5], 1

</llo_original>
